<compile_context>
chip_gen: v6e
topology: v6e:2x2x1
jax: 0.10.0
libtpu: 0.0.40
codegen_flags: <defaults>
</compile_context>

<pallas_src>
import functools

import jax
import jax.numpy as jnp
from jax.experimental import pallas as pl
from jax.experimental.pallas import tpu as pltpu


# Fan-ins at or below this use VPU broadcast-FMAs instead of the MXU.
_SMALL_FANIN_VPU = 8


def _round_up(n, m):
    return pl.cdiv(n, m) * m


def _make_pinn_kernel(num_hidden, use_bf16_matmul):
    """tanh(W1 @ x + b1) -> ... -> tanh(Wh @ . + bh) -> head(.)."""

    def kernel(*refs):
        x_ref = refs[0]
        out_ref = refs[-1]
        params = refs[1:-1]  # alternating (W_i, b_i); last pair = output head

        # (in_dim, TILE_B): batch on the lane axis.
        h = x_ref[...].astype(jnp.float32)

        for i in range(num_hidden):
            w = params[2 * i][...]        # (out_i, in_i)  — PyTorch layout
            b = params[2 * i + 1][...]    # (out_i, 1)     — broadcasts over lanes
            fan_in = h.shape[0]
            if i == 0 and fan_in <= _SMALL_FANIN_VPU:
                # K=2 contraction: a full MXU push for 2/256 of the systolic
                # depth is wasted.  Do it on the VPU: w[:, k] (out,1) broadcasts
                # over lanes, h[k, :] (1,TILE_B) broadcasts over sublanes.
                z = b
                for k in range(fan_in):
                    z = z + w[:, k:k + 1] * h[k:k + 1, :]
            else:
                if use_bf16_matmul:
                    # Optional: bf16 operands, f32 accumulate (precision
                    # tradeoff — validate against the f32 reference).
                    z = jnp.dot(w.astype(jnp.bfloat16),
                                h.astype(jnp.bfloat16),
                                preferred_element_type=jnp.float32) + b
                else:
                    z = jnp.dot(w, h, preferred_element_type=jnp.float32) + b
            h = jnp.tanh(z)

        w_head = params[-2][...]
        b_head = params[-1][...]          # (out_dim, 1)
        out_dim = out_ref.shape[0]
        if out_dim == 1:
            # 32 -> 1 head: lane-wise multiply + cross-sublane reduce.  Avoids
            # a 1-wide MXU pass; keeps the (1, TILE_B) store lane-dense.
            # w_head arrives as (hidden, 1).
            acc = jnp.sum(w_head * h, axis=0, keepdims=True)   # (1, TILE_B)
        else:
            # w_head arrives in PyTorch (out_dim, hidden) layout.
            acc = jnp.dot(w_head, h, preferred_element_type=jnp.float32)
        out_ref[...] = (acc + b_head).astype(out_ref.dtype)

    return kernel


def init_pinn_params(key, layers):
    """Xavier-normal weights, zero biases — matches the PyTorch __init__."""
    params = []
    for i in range(len(layers) - 1):
        fan_in, fan_out = layers[i], layers[i + 1]
        key, sub = jax.random.split(key)
        std = (2.0 / (fan_in + fan_out)) ** 0.5
        # Stored PyTorch-style as (out, in).
        w = std * jax.random.normal(sub, (fan_out, fan_in), dtype=jnp.float32)
        b = jnp.zeros((fan_out,), dtype=jnp.float32)
        params.append((w, b))
    return params


@functools.partial(
    jax.jit, static_argnames=("num_hidden", "tile_b", "use_bf16_matmul"))
def pinn_forward(xt, flat_params, *, num_hidden, tile_b, use_bf16_matmul=False):
    """xt: (in_dim, padded_batch), padded_batch % tile_b == 0.
    flat_params already in kernel layout:
      [W1(out,in), b1(out,1), ..., Wh, bh, Whead, bhead(out,1)]."""
    in_dim, padded_batch = xt.shape
    out_dim = flat_params[-1].shape[0]
    grid = (padded_batch // tile_b,)

    kernel = _make_pinn_kernel(num_hidden, use_bf16_matmul)

    # X / out tiled along the batch (lane) axis -> pipelined, double-buffered.
    x_spec = pl.BlockSpec((in_dim, tile_b), lambda i: (0, i))
    out_spec = pl.BlockSpec((out_dim, tile_b), lambda i: (0, i))
    # Weights/biases: full-array blocks with constant index_map so they stay
    # resident in VMEM across all batch tiles (no per-step re-fetch).
    param_specs = [pl.BlockSpec(p.shape, lambda i: (0, 0)) for p in flat_params]

    return pl.pallas_call(
        kernel,
        out_shape=jax.ShapeDtypeStruct((out_dim, padded_batch), xt.dtype),
        grid=grid,
        in_specs=[x_spec] + param_specs,
        out_specs=out_spec,
        compiler_params=pltpu.CompilerParams(
            # Batch tiles are independent -> shard across TCs on v7x megacore.
            # (No-op on single-TC v5e/v6e; the real lever there is tile size.)
            dimension_semantics=("parallel",),
        ),
    )(xt, *flat_params)


def pinn_apply(x, params, tile_b=2048, x_is_feature_major=False,
               use_bf16_matmul=False):
    """Run the PINN forward.

    x: (batch, in_dim) like the PyTorch module, or (in_dim, batch) if
       x_is_feature_major=True (preferred for large collocation sets — skips
       the wrapper-side transpose pass over X entirely).
    tile_b: batch tile (multiple of 128). 2048-8192 amortizes per-step
       overhead; don't exceed what keeps >=2 grid steps on v7x.
    """
    out_dim = params[-1][0].shape[0]

    if x_is_feature_major:
        xt = jnp.asarray(x, dtype=jnp.float32)            # (in_dim, batch)
        batch = xt.shape[1]
    else:
        # Compatibility path for the PyTorch (batch, in_dim) layout.  This
        # standalone transpose re-reads/rewrites all of X before the kernel;
        # keep points feature-major upstream when batch is large.
        xt = jnp.transpose(jnp.asarray(x, dtype=jnp.float32))
        batch = x.shape[0]

    # Batch tile: multiple of 128 (lane axis), capped at the rounded batch.
    tile = min(int(tile_b), int(_round_up(batch, 128)))
    tile = int(_round_up(tile, 128))
    padded = int(_round_up(batch, tile))
    if padded != batch:
        xt = jnp.pad(xt, ((0, 0), (0, padded - batch)))

    flat = []
    for w, b in params[:-1]:
        flat.append(jnp.asarray(w, jnp.float32))             # (out, in)
        flat.append(jnp.asarray(b, jnp.float32)[:, None])    # (out, 1)
    wo, bo = params[-1]
    wo = jnp.asarray(wo, jnp.float32)
    if out_dim == 1:
        flat.append(wo.T)                 # (hidden, 1) for the VPU head
    else:
        flat.append(wo)                   # (out_dim, hidden) for the MXU head
    flat.append(jnp.asarray(bo, jnp.float32)[:, None])

    num_hidden = len(params) - 1
    out_t = pinn_forward(xt, tuple(flat), num_hidden=num_hidden, tile_b=tile,
                         use_bf16_matmul=use_bf16_matmul)   # (out_dim, padded)
    return jnp.transpose(out_t)[:batch]                      # (batch, out_dim)


def pinn_reference(x, params):
    """Plain-JAX reference of the PyTorch forward, for sanity checking."""
    h = x
    for w, b in params[:-1]:
        h = jnp.tanh(h @ w.T + b)
    wo, bo = params[-1]
    return h @ wo.T + bo


if __name__ == "__main__":
    # PINN for the heat equation: (x, t) -> u.
    layers = [2, 32, 32, 1]
    batch = 4096         # small collocation set (32 KiB of input)
    tile_b = 2048        # multiple of 128; gives a 2-step grid (both v7x TCs)

    key = jax.random.PRNGKey(0)
    key, kx = jax.random.split(key)
    X = jax.random.normal(kx, (batch, layers[0]), dtype=jnp.float32)

    params = init_pinn_params(key, layers)

    # PyTorch-style (batch, in_dim) input path.
    out = pinn_apply(X, params, tile_b=tile_b)
    out = jax.block_until_ready(out)

    ref = pinn_reference(X, params)
    assert out.shape == (batch, layers[-1])
    assert jnp.allclose(out, ref, atol=1e-5, rtol=1e-5), "mismatch vs reference"

    # Feature-major fast path (no wrapper transpose over X).
    out_fm = pinn_apply(X.T, params, tile_b=tile_b, x_is_feature_major=True)
    out_fm = jax.block_until_ready(out_fm)
    assert jnp.allclose(out_fm, ref, atol=1e-5, rtol=1e-5), "feature-major mismatch"

    print("KERNEL_OK")
</pallas_src>

<mosaic_0001>
module attributes {stable_mosaic.version = 11 : i64} {
  func.func @kernel(%arg0: i32, %arg1: memref<2x2048xf32, #tpu.memory_space<vmem>>, %arg2: memref<32x2xf32, #tpu.memory_space<vmem>>, %arg3: memref<32x1xf32, #tpu.memory_space<vmem>>, %arg4: memref<32x32xf32, #tpu.memory_space<vmem>>, %arg5: memref<32x1xf32, #tpu.memory_space<vmem>>, %arg6: memref<32x1xf32, #tpu.memory_space<vmem>>, %arg7: memref<1x1xf32, #tpu.memory_space<vmem>>, %arg8: memref<1x2048xf32, #tpu.memory_space<vmem>>) attributes {dimension_semantics = [#tpu.dimension_semantics<parallel>], iteration_bounds = array<i64: 2>, scalar_prefetch = 0 : i64, scratch_operands = 0 : i64, tpu.core_type = #tpu.core_type<tc>, window_params = [{transform_indices = @transform_0, window_bounds = array<i64: 2, 2048>}, {pipeline_mode = #tpu.pipeline_mode<synchronous>, transform_indices = @transform_1, window_bounds = array<i64: 32, 2>}, {pipeline_mode = #tpu.pipeline_mode<synchronous>, transform_indices = @transform_2, window_bounds = array<i64: 32, 1>}, {pipeline_mode = #tpu.pipeline_mode<synchronous>, transform_indices = @transform_3, window_bounds = array<i64: 32, 32>}, {pipeline_mode = #tpu.pipeline_mode<synchronous>, transform_indices = @transform_4, window_bounds = array<i64: 32, 1>}, {pipeline_mode = #tpu.pipeline_mode<synchronous>, transform_indices = @transform_5, window_bounds = array<i64: 32, 1>}, {pipeline_mode = #tpu.pipeline_mode<synchronous>, transform_indices = @transform_6, window_bounds = array<i64: 1, 1>}, {transform_indices = @transform_7, window_bounds = array<i64: 1, 2048>}]} {
    %c0 = arith.constant 0 : index
    %c0_0 = arith.constant 0 : index
    %0 = vector.load %arg1[%c0, %c0_0] : memref<2x2048xf32, #tpu.memory_space<vmem>>, vector<2x2048xf32>
    %c0_1 = arith.constant 0 : index
    %c0_2 = arith.constant 0 : index
    %1 = vector.load %arg2[%c0_1, %c0_2] : memref<32x2xf32, #tpu.memory_space<vmem>>, vector<32x2xf32>
    %c0_3 = arith.constant 0 : index
    %c0_4 = arith.constant 0 : index
    %2 = vector.load %arg3[%c0_3, %c0_4] : memref<32x1xf32, #tpu.memory_space<vmem>>, vector<32x1xf32>
    %3 = vector.extract_strided_slice %1 {offsets = [0, 0], sizes = [32, 1], strides = [1, 1]} : vector<32x2xf32> to vector<32x1xf32>
    %4 = vector.extract_strided_slice %0 {offsets = [0, 0], sizes = [1, 2048], strides = [1, 1]} : vector<2x2048xf32> to vector<1x2048xf32>
    %5 = vector.broadcast %3 : vector<32x1xf32> to vector<32x2048xf32>
    %6 = vector.broadcast %4 : vector<1x2048xf32> to vector<32x2048xf32>
    %7 = arith.mulf %5, %6 : vector<32x2048xf32>
    %8 = vector.broadcast %2 : vector<32x1xf32> to vector<32x2048xf32>
    %9 = arith.addf %8, %7 : vector<32x2048xf32>
    %10 = vector.extract_strided_slice %1 {offsets = [0, 1], sizes = [32, 1], strides = [1, 1]} : vector<32x2xf32> to vector<32x1xf32>
    %11 = vector.extract_strided_slice %0 {offsets = [1, 0], sizes = [1, 2048], strides = [1, 1]} : vector<2x2048xf32> to vector<1x2048xf32>
    %12 = vector.broadcast %10 : vector<32x1xf32> to vector<32x2048xf32>
    %13 = vector.broadcast %11 : vector<1x2048xf32> to vector<32x2048xf32>
    %14 = arith.mulf %12, %13 : vector<32x2048xf32>
    %15 = arith.addf %9, %14 : vector<32x2048xf32>
    %16 = math.tanh %15 : vector<32x2048xf32>
    %c0_5 = arith.constant 0 : index
    %c0_6 = arith.constant 0 : index
    %17 = vector.load %arg4[%c0_5, %c0_6] : memref<32x32xf32, #tpu.memory_space<vmem>>, vector<32x32xf32>
    %c0_7 = arith.constant 0 : index
    %c0_8 = arith.constant 0 : index
    %18 = vector.load %arg5[%c0_7, %c0_8] : memref<32x1xf32, #tpu.memory_space<vmem>>, vector<32x1xf32>
    %cst = arith.constant dense<0.000000e+00> : vector<32x2048xf32>
    %19 = tpu.matmul %17, %16, %cst {dimension_numbers = #tpu.dot_dimension_numbers<[1], [0], [0], [1], [0, 0, 1, 1], [], []>} : vector<32x32xf32>, vector<32x2048xf32>, vector<32x2048xf32> -> vector<32x2048xf32>
    %20 = vector.broadcast %18 : vector<32x1xf32> to vector<32x2048xf32>
    %21 = arith.addf %19, %20 : vector<32x2048xf32>
    %22 = math.tanh %21 : vector<32x2048xf32>
    %c0_9 = arith.constant 0 : index
    %c0_10 = arith.constant 0 : index
    %23 = vector.load %arg6[%c0_9, %c0_10] : memref<32x1xf32, #tpu.memory_space<vmem>>, vector<32x1xf32>
    %c0_11 = arith.constant 0 : index
    %c0_12 = arith.constant 0 : index
    %24 = vector.load %arg7[%c0_11, %c0_12] : memref<1x1xf32, #tpu.memory_space<vmem>>, vector<1x1xf32>
    %25 = vector.broadcast %23 : vector<32x1xf32> to vector<32x2048xf32>
    %26 = arith.mulf %25, %22 : vector<32x2048xf32>
    %cst_13 = arith.constant dense<0.000000e+00> : vector<2048xf32>
    %27 = vector.multi_reduction <add>, %26, %cst_13 [0] : vector<32x2048xf32> to vector<2048xf32>
    %28 = vector.shape_cast %27 : vector<2048xf32> to vector<1x2048xf32>
    %29 = vector.broadcast %24 : vector<1x1xf32> to vector<1x2048xf32>
    %30 = arith.addf %28, %29 : vector<1x2048xf32>
    %c0_14 = arith.constant 0 : index
    %c0_15 = arith.constant 0 : index
    %31 = vector.load %arg8[%c0_14, %c0_15] : memref<1x2048xf32, #tpu.memory_space<vmem>>, vector<1x2048xf32>
    tpu.vector_store %arg8[%c0_14, %c0_15], %30 {strides = array<i32>} : memref<1x2048xf32, #tpu.memory_space<vmem>>, vector<1x2048xf32>,
    return
  }
  func.func @transform_0(%arg0: i32) -> (i32, i32) {
    %c0_i32 = arith.constant 0 : i32
    %c0_i32_0 = arith.constant 0 : i32
    return %c0_i32, %arg0 : i32, i32
  }
  func.func @transform_1(%arg0: i32) -> (i32, i32) {
    %c0_i32 = arith.constant 0 : i32
    %c0_i32_0 = arith.constant 0 : i32
    %c0_i32_1 = arith.constant 0 : i32
    return %c0_i32, %c0_i32_0 : i32, i32
  }
  func.func @transform_2(%arg0: i32) -> (i32, i32) {
    %c0_i32 = arith.constant 0 : i32
    %c0_i32_0 = arith.constant 0 : i32
    %c0_i32_1 = arith.constant 0 : i32
    return %c0_i32, %c0_i32_0 : i32, i32
  }
  func.func @transform_3(%arg0: i32) -> (i32, i32) {
    %c0_i32 = arith.constant 0 : i32
    %c0_i32_0 = arith.constant 0 : i32
    %c0_i32_1 = arith.constant 0 : i32
    return %c0_i32, %c0_i32_0 : i32, i32
  }
  func.func @transform_4(%arg0: i32) -> (i32, i32) {
    %c0_i32 = arith.constant 0 : i32
    %c0_i32_0 = arith.constant 0 : i32
    %c0_i32_1 = arith.constant 0 : i32
    return %c0_i32, %c0_i32_0 : i32, i32
  }
  func.func @transform_5(%arg0: i32) -> (i32, i32) {
    %c0_i32 = arith.constant 0 : i32
    %c0_i32_0 = arith.constant 0 : i32
    %c0_i32_1 = arith.constant 0 : i32
    return %c0_i32, %c0_i32_0 : i32, i32
  }
  func.func @transform_6(%arg0: i32) -> (i32, i32) {
    %c0_i32 = arith.constant 0 : i32
    %c0_i32_0 = arith.constant 0 : i32
    %c0_i32_1 = arith.constant 0 : i32
    return %c0_i32, %c0_i32_0 : i32, i32
  }
  func.func @transform_7(%arg0: i32) -> (i32, i32) {
    %c0_i32 = arith.constant 0 : i32
    %c0_i32_0 = arith.constant 0 : i32
    return %c0_i32, %arg0 : i32, i32
  }
}

</mosaic_0001>

<llo_original>
// kernel: pinn_forward.1
$region0: #{pinn_forward.1}
  #allocation0 [shape = 'u32[]', space=smem, size = 0x4, offset = 0x4, fixed_abs, tag = 'smem constant byte address 0x4 - core index']
  #allocation1 [shape = 'u32[144,128]{1,0:T(1,128)}', space=vmem, size = 0x12000, scoped, tag = 'internal scratch']
  #allocation2 [shape = 'f32[1,1]{1,0:T(1,128)S(1)}', space=vmem, size = 0x200, scoped, tag = 'scoped memory for pinn_forward.1']
  %s0 = inlined_call_operand.vmem [shape: f32[2,4096], index: 0, kind: input, shape index: {}]
  %s1 = inlined_call_operand.vmem [shape: f32[32,2], index: 1, kind: input, shape index: {}]
  %s2 = inlined_call_operand.vmem [shape: f32[32,1], index: 2, kind: input, shape index: {}]
  %s3 = inlined_call_operand.vmem [shape: f32[32,32], index: 3, kind: input, shape index: {}]
  %s4 = inlined_call_operand.vmem [shape: f32[32,1], index: 4, kind: input, shape index: {}]
  %s5 = inlined_call_operand.vmem [shape: f32[32,1], index: 5, kind: input, shape index: {}]
  %s6 = inlined_call_operand.<no memory space> [shape: f32[1,1], index: 6, kind: input, shape index: {}]
  %s7 = inlined_call_operand.hbm [shape: f32[1,4096], index: 7, kind: output, shape index: {}]
  %s8 = sld [smem:[#allocation0]]
  $region61: #{pinn_forward.1} parent=0
    _
  %s10 = ssub.s32 1, %s8
  %s11 = scalar_select 0, %s10, %s8
  %v12 = vstv %s6
  %13 = vst [vmem:[#allocation2] sm:$0x1] %v12
  $region1: #{pinn_forward.1} parent=0
    #allocation3 [shape = 'u8[16384]{0}', space=vmem, size = 0x4000, scoped, tag = 'output window, operand 0']
    #allocation4 [shape = 's32[2]{0}', space=sflag, size = 0x8, scoped, tag = 'scoped memory for pinn_forward.1']
    %14 = vsyncpa [#allocation4], 0
    %s15 = scalar_lea.sflag [#allocation4], 1
    %16 = vsyncpa %s15, 0
    loop: start=0, step=1, limit=4
    $region2: #{pinn_forward.1} parent=1 // loop_pre_header
      _
    $region3: #{pinn_forward.1} parent=1 // loop_header
      %s18 = sphi 0, %s22
      %p19 = scmp.ge.s32.totalorder %s18, 4
      %s28 = sphi 0, %s30
      %s31 = sphi 0, %s28
      %s32 = sphi 0, %s31
      %s48 = sphi 0, %s32
      %s52 = sphi 0, %s52
      %s54 = sphi 0, %s52
      %s55 = sphi 0, %s54
      %s69 = sphi 0, %s55
      %s73 = sphi 0, %s73
      %s75 = sphi 0, %s73
      %s76 = sphi 0, %s75
      %s90 = sphi 0, %s76
      %s94 = sphi 0, %s94
      %s96 = sphi 0, %s94
      %s97 = sphi 0, %s96
      %s111 = sphi 0, %s97
      %s115 = sphi 0, %s115
      %s117 = sphi 0, %s115
      %s118 = sphi 0, %s117
      %s132 = sphi 0, %s118
      %s136 = sphi 0, %s136
      %s138 = sphi 0, %s136
      %s139 = sphi 0, %s138
      %s153 = sphi 0, %s139
      %s157 = sphi 0, %s157
      %s159 = sphi 0, %s157
      %s160 = sphi 0, %s159
      %s174 = sphi 0, %s160
      %s180 = sphi 0, %s182
      %s183 = sphi 0, %s180
      %s184 = sphi 0, %s183
      %s200 = sphi 0, %s184
    $region4: #{pinn_forward.1} parent=1 // loop_header_branch
      %21 = sbr.rel (%p19) target = $region8
    $region5: #{pinn_forward.1} parent=1 // loop_body
      %s23 = ssub.s32 %s18, 1
      %s24 = ssub.s32 %s18, 2
      %s25 = sadd.s32 %s18, 1
      %s26 = ssub.s32 %s18, %s25
      %p27 = scmp.eq.s32.totalorder %s26, 0
      %s29 = sadd.s32 %s28, 1
      %s30 = scalar_select %p27, %s28, %s29
      %p33 = pneg %p27
      %p34 = scmp.eq.s32.totalorder %s18, 1
      %p35 = por %p33, %p34
      %p36 = scmp.ne.s32.totalorder %s28, %s31
      %p37 = scmp.eq.s32.totalorder %s18, 0
      %p38 = por %p36, %p37
      %p39 = scmp.ne.s32.totalorder %s28, %s31
      %p40 = scmp.eq.s32.totalorder %s23, 1
      %p41 = por %p39, %p40
      %p42 = scmp.ne.s32.totalorder %s31, %s32
      %p43 = scmp.eq.s32.totalorder %s23, 0
      %p44 = por %p42, %p43
      %p45 = scmp.ne.s32.totalorder %s31, %s32
      %p46 = scmp.eq.s32.totalorder %s24, 1
      %p47 = por %p45, %p46
      %p49 = scmp.ne.s32.totalorder %s32, %s48
      %p50 = scmp.eq.s32.totalorder %s24, 0
      %p51 = por %p49, %p50
      %s53 = sadd.s32 %s52, 1
      %p56 = scmp.eq.s32.totalorder %s18, 1
      %p57 = scmp.ne.s32.totalorder %s52, %s54
      %p58 = scmp.eq.s32.totalorder %s18, 0
      %p59 = por %p57, %p58
      %p60 = scmp.ne.s32.totalorder %s52, %s54
      %p61 = scmp.eq.s32.totalorder %s23, 1
      %p62 = por %p60, %p61
      %p63 = scmp.ne.s32.totalorder %s54, %s55
      %p64 = scmp.eq.s32.totalorder %s23, 0
      %p65 = por %p63, %p64
      %p66 = scmp.ne.s32.totalorder %s54, %s55
      %p67 = scmp.eq.s32.totalorder %s24, 1
      %p68 = por %p66, %p67
      %p70 = scmp.ne.s32.totalorder %s55, %s69
      %p71 = scmp.eq.s32.totalorder %s24, 0
      %p72 = por %p70, %p71
      %s74 = sadd.s32 %s73, 1
      %p77 = scmp.eq.s32.totalorder %s18, 1
      %p78 = scmp.ne.s32.totalorder %s73, %s75
      %p79 = scmp.eq.s32.totalorder %s18, 0
      %p80 = por %p78, %p79
      %p81 = scmp.ne.s32.totalorder %s73, %s75
      %p82 = scmp.eq.s32.totalorder %s23, 1
      %p83 = por %p81, %p82
      %p84 = scmp.ne.s32.totalorder %s75, %s76
      %p85 = scmp.eq.s32.totalorder %s23, 0
      %p86 = por %p84, %p85
      %p87 = scmp.ne.s32.totalorder %s75, %s76
      %p88 = scmp.eq.s32.totalorder %s24, 1
      %p89 = por %p87, %p88
      %p91 = scmp.ne.s32.totalorder %s76, %s90
      %p92 = scmp.eq.s32.totalorder %s24, 0
      %p93 = por %p91, %p92
      %s95 = sadd.s32 %s94, 1
      %p98 = scmp.eq.s32.totalorder %s18, 1
      %p99 = scmp.ne.s32.totalorder %s94, %s96
      %p100 = scmp.eq.s32.totalorder %s18, 0
      %p101 = por %p99, %p100
      %p102 = scmp.ne.s32.totalorder %s94, %s96
      %p103 = scmp.eq.s32.totalorder %s23, 1
      %p104 = por %p102, %p103
      %p105 = scmp.ne.s32.totalorder %s96, %s97
      %p106 = scmp.eq.s32.totalorder %s23, 0
      %p107 = por %p105, %p106
      %p108 = scmp.ne.s32.totalorder %s96, %s97
      %p109 = scmp.eq.s32.totalorder %s24, 1
      %p110 = por %p108, %p109
      %p112 = scmp.ne.s32.totalorder %s97, %s111
      %p113 = scmp.eq.s32.totalorder %s24, 0
      %p114 = por %p112, %p113
      %s116 = sadd.s32 %s115, 1
      %p119 = scmp.eq.s32.totalorder %s18, 1
      %p120 = scmp.ne.s32.totalorder %s115, %s117
      %p121 = scmp.eq.s32.totalorder %s18, 0
      %p122 = por %p120, %p121
      %p123 = scmp.ne.s32.totalorder %s115, %s117
      %p124 = scmp.eq.s32.totalorder %s23, 1
      %p125 = por %p123, %p124
      %p126 = scmp.ne.s32.totalorder %s117, %s118
      %p127 = scmp.eq.s32.totalorder %s23, 0
      %p128 = por %p126, %p127
      %p129 = scmp.ne.s32.totalorder %s117, %s118
      %p130 = scmp.eq.s32.totalorder %s24, 1
      %p131 = por %p129, %p130
      %p133 = scmp.ne.s32.totalorder %s118, %s132
      %p134 = scmp.eq.s32.totalorder %s24, 0
      %p135 = por %p133, %p134
      %s137 = sadd.s32 %s136, 1
      %p140 = scmp.eq.s32.totalorder %s18, 1
      %p141 = scmp.ne.s32.totalorder %s136, %s138
      %p142 = scmp.eq.s32.totalorder %s18, 0
      %p143 = por %p141, %p142
      %p144 = scmp.ne.s32.totalorder %s136, %s138
      %p145 = scmp.eq.s32.totalorder %s23, 1
      %p146 = por %p144, %p145
      %p147 = scmp.ne.s32.totalorder %s138, %s139
      %p148 = scmp.eq.s32.totalorder %s23, 0
      %p149 = por %p147, %p148
      %p150 = scmp.ne.s32.totalorder %s138, %s139
      %p151 = scmp.eq.s32.totalorder %s24, 1
      %p152 = por %p150, %p151
      %p154 = scmp.ne.s32.totalorder %s139, %s153
      %p155 = scmp.eq.s32.totalorder %s24, 0
      %p156 = por %p154, %p155
      %s158 = sadd.s32 %s157, 1
      %p161 = scmp.eq.s32.totalorder %s18, 1
      %p162 = scmp.ne.s32.totalorder %s157, %s159
      %p163 = scmp.eq.s32.totalorder %s18, 0
      %p164 = por %p162, %p163
      %p165 = scmp.ne.s32.totalorder %s157, %s159
      %p166 = scmp.eq.s32.totalorder %s23, 1
      %p167 = por %p165, %p166
      %p168 = scmp.ne.s32.totalorder %s159, %s160
      %p169 = scmp.eq.s32.totalorder %s23, 0
      %p170 = por %p168, %p169
      %p171 = scmp.ne.s32.totalorder %s159, %s160
      %p172 = scmp.eq.s32.totalorder %s24, 1
      %p173 = por %p171, %p172
      %p175 = scmp.ne.s32.totalorder %s160, %s174
      %p176 = scmp.eq.s32.totalorder %s24, 0
      %p177 = por %p175, %p176
      %s178 = ssub.s32 %s18, %s25
      %p179 = scmp.eq.s32.totalorder %s178, 0
      %s181 = sadd.s32 %s180, 1
      %s182 = scalar_select %p179, %s180, %s181
      %p185 = pneg %p179
      %p186 = scmp.eq.s32.totalorder %s18, 1
      %p187 = por %p185, %p186
      %p188 = scmp.ne.s32.totalorder %s180, %s183
      %p189 = scmp.eq.s32.totalorder %s18, 0
      %p190 = por %p188, %p189
      %p191 = scmp.ne.s32.totalorder %s180, %s183
      %p192 = scmp.eq.s32.totalorder %s23, 1
      %p193 = por %p191, %p192
      %p194 = scmp.ne.s32.totalorder %s183, %s184
      %p195 = scmp.eq.s32.totalorder %s23, 0
      %p196 = por %p194, %p195
      %p197 = scmp.ne.s32.totalorder %s183, %s184
      %p198 = scmp.eq.s32.totalorder %s24, 1
      %p199 = por %p197, %p198
      %p201 = scmp.ne.s32.totalorder %s184, %s200
      %p202 = scmp.eq.s32.totalorder %s24, 0
      %p203 = por %p201, %p202
      %p204 = scmp.le.s32.totalorder 1, %s18
      %p205 = scmp.lt.s32.totalorder %s18, 3
      %p206 = pnand %p204, %p205
      %p207 = pneg %p206
      // Predicated region
      $region9: #{pinn_forward.1} parent=5 // pred_check
        _
      $region10: #{pinn_forward.1} parent=5 // pred_check_branch
        %209 = sbr.rel (%p206) target = $region12
      $region11: #{pinn_forward.1} parent=5 // pred_region
        %s210 = ssub.s32 %s18, 1
        // Predicated region
        $region13: #{pinn_forward.1} parent=11 // pred_check
          %p211 = pneg %p65
        $region14: #{pinn_forward.1} parent=11 // pred_check_branch
          %213 = sbr.rel (%p211) target = $region16
        $region15: #{pinn_forward.1} parent=11 // pred_region
          _
        $region16: #{pinn_forward.1} parent=11 // pred_fallthru
          _
        // Predicated region
        $region17: #{pinn_forward.1} parent=11 // pred_check
          %p214 = pneg %p86
        $region18: #{pinn_forward.1} parent=11 // pred_check_branch
          %216 = sbr.rel (%p214) target = $region20
        $region19: #{pinn_forward.1} parent=11 // pred_region
          _
        $region20: #{pinn_forward.1} parent=11 // pred_fallthru
          _
        // Predicated region
        $region21: #{pinn_forward.1} parent=11 // pred_check
          %p217 = pneg %p107
        $region22: #{pinn_forward.1} parent=11 // pred_check_branch
          %219 = sbr.rel (%p217) target = $region24
        $region23: #{pinn_forward.1} parent=11 // pred_region
          _
        $region24: #{pinn_forward.1} parent=11 // pred_fallthru
          _
        // Predicated region
        $region25: #{pinn_forward.1} parent=11 // pred_check
          %p220 = pneg %p128
        $region26: #{pinn_forward.1} parent=11 // pred_check_branch
          %222 = sbr.rel (%p220) target = $region28
        $region27: #{pinn_forward.1} parent=11 // pred_region
          _
        $region28: #{pinn_forward.1} parent=11 // pred_fallthru
          _
        // Predicated region
        $region29: #{pinn_forward.1} parent=11 // pred_check
          %p223 = pneg %p149
        $region30: #{pinn_forward.1} parent=11 // pred_check_branch
          %225 = sbr.rel (%p223) target = $region32
        $region31: #{pinn_forward.1} parent=11 // pred_region
          _
        $region32: #{pinn_forward.1} parent=11 // pred_fallthru
          _
        // Predicated region
        $region33: #{pinn_forward.1} parent=11 // pred_check
          %p226 = pneg %p170
        $region34: #{pinn_forward.1} parent=11 // pred_check_branch
          %228 = sbr.rel (%p226) target = $region36
        $region35: #{pinn_forward.1} parent=11 // pred_region
          _
        $region36: #{pinn_forward.1} parent=11 // pred_fallthru
          _
      $region12: #{pinn_forward.1} parent=5 // pred_fallthru
        _
      %p229 = scmp.lt.s32.totalorder %s18, 2
      // Predicated region
      $region37: #{pinn_forward.1} parent=5 // pred_check
        %p230 = pneg %p229
      $region38: #{pinn_forward.1} parent=5 // pred_check_branch
        %232 = sbr.rel (%p230) target = $region40
      $region39: #{pinn_forward.1} parent=5 // pred_region
        // Predicated region
        $region41: #{pinn_forward.1} parent=39 // pred_check
          %p233 = pneg %p38
        $region42: #{pinn_forward.1} parent=39 // pred_check_branch
          %235 = sbr.rel (%p233) target = $region44
        $region43: #{pinn_forward.1} parent=39 // pred_region
          %s236 = smul.u32 16, %s18
          %p237 = scmp.lt.s32.totalorder %s236, 31
          %s238 = scalar_select %p237, %s236, 31
          %s239 = smul.addr %s238, 2
          %s240 = scalar_lea.vmem %s0, %s239
          %s241 = smul.u32 16, %s18
        $region44: #{pinn_forward.1} parent=39 // pred_fallthru
          _
      $region40: #{pinn_forward.1} parent=5 // pred_fallthru
        _
      %p242 = scmp.le.s32.totalorder 1, %s18
      %p243 = scmp.lt.s32.totalorder %s18, 3
      %p244 = pnand %p242, %p243
      %p245 = pneg %p244
      // Predicated region
      $region45: #{pinn_forward.1} parent=5 // pred_check
        _
      $region46: #{pinn_forward.1} parent=5 // pred_check_branch
        %247 = sbr.rel (%p244) target = $region48
      $region47: #{pinn_forward.1} parent=5 // pred_region
        %s248 = ssub.s32 %s18, 1
        %s249 = smul.u32 16, %s23
        %p250 = scmp.lt.s32.totalorder %s249, 31
        %s251 = scalar_select %p250, %s249, 31
        %s252 = smul.addr %s251, 2
        %s253 = scalar_lea.vmem %s0, %s252
        %p254 = pneg %p44
        %p255 = pneg %p41
        %p256 = pneg %p65
        %p257 = pneg %p62
        %p258 = pneg %p86
        %p259 = pneg %p83
        %p260 = pneg %p107
        %p261 = pneg %p104
        %p262 = pneg %p128
        %p263 = pneg %p125
        %p264 = pneg %p149
        %p265 = pneg %p146
        %p266 = pneg %p170
        %p267 = pneg %p167
        %p268 = pneg %p196
        %p269 = pneg %p193
        %s270 = sand.u32 %s183, 1
        %s271 = scalar_lea.sflag [#allocation4], %s270
        %s272 = sand.u32 %s183, 1
        %s273 = smul.addr %s272, 16
        %s274 = scalar_lea.vmem [#allocation3], %s273
        %s275 = smul.u32 16, %s23
        %p276 = scmp.lt.s32.totalorder %s275, 31
        %s277 = scalar_select %p276, %s275, 31
        %s278 = smul.addr %s277, 2
        %s279 = scalar_lea.vmem %s0, %s278
        %s280 = smul.u32 16, %s23
        %s281 = smul.u32 16, %s23
        %v282 = vld [vmem:[%s279] sm:$0xff]
        %v283 = vld [vmem:[%s279 + $0x8] sm:$0xff]
        %v284 = vld [vmem:[%s279 + $0x10] sm:$0xff]
        %v285 = vld [vmem:[%s279 + $0x18] sm:$0xff]
        %v286 = vld [vmem:[%s1] sm:$0xff]
        %v287 = vld [vmem:[%s1 + $0x8] sm:$0xff]
        %v288 = vld [vmem:[%s1 + $0x10] sm:$0xff]
        %v289 = vld [vmem:[%s1 + $0x18] sm:$0xff]
        %v290 = vld [vmem:[%s2] sm:$0xff]
        %v291 = vld [vmem:[%s2 + $0x8] sm:$0xff]
        %v292 = vld [vmem:[%s2 + $0x10] sm:$0xff]
        %v293 = vld [vmem:[%s2 + $0x18] sm:$0xff]
        %295 = vset.pattern.permute.xlu0 0
        %296 = vperm.xlu0 %295, %v286
        %v297 = vpop.permute.xlu0 %296
        %300 = vset.pattern.permute.xlu0 0
        %301 = vperm.xlu0 %300, %v287
        %v302 = vpop.permute.xlu0 %301
        %305 = vset.pattern.permute.xlu0 0
        %306 = vperm.xlu0 %305, %v288
        %v307 = vpop.permute.xlu0 %306
        %310 = vset.pattern.permute.xlu0 0
        %311 = vperm.xlu0 %310, %v289
        %v312 = vpop.permute.xlu0 %311
        %v318 = vlaneseq
        %v319 = vshrl.u32 %v318, 7
        %v320 = vsub.s32 0, %v319
        %v321 = vrot.slane %v282, %v320
        %v322 = vlaneseq
        %v323 = vshrl.u32 %v322, 7
        %v324 = vsub.s32 2, %v323
        %v325 = vrot.slane %v282, %v324
        %v326 = vlaneseq
        %v327 = vshrl.u32 %v326, 7
        %v328 = vsub.s32 4, %v327
        %v329 = vrot.slane %v282, %v328
        %v330 = vlaneseq
        %v331 = vshrl.u32 %v330, 7
        %v332 = vsub.s32 6, %v331
        %v333 = vrot.slane %v282, %v332
        %v334 = vlaneseq
        %v335 = vshrl.u32 %v334, 7
        %v336 = vsub.s32 0, %v335
        %v337 = vrot.slane %v283, %v336
        %v338 = vlaneseq
        %v339 = vshrl.u32 %v338, 7
        %v340 = vsub.s32 2, %v339
        %v341 = vrot.slane %v283, %v340
        %v342 = vlaneseq
        %v343 = vshrl.u32 %v342, 7
        %v344 = vsub.s32 4, %v343
        %v345 = vrot.slane %v283, %v344
        %v346 = vlaneseq
        %v347 = vshrl.u32 %v346, 7
        %v348 = vsub.s32 6, %v347
        %v349 = vrot.slane %v283, %v348
        %v350 = vlaneseq
        %v351 = vshrl.u32 %v350, 7
        %v352 = vsub.s32 0, %v351
        %v353 = vrot.slane %v284, %v352
        %v354 = vlaneseq
        %v355 = vshrl.u32 %v354, 7
        %v356 = vsub.s32 2, %v355
        %v357 = vrot.slane %v284, %v356
        %v358 = vlaneseq
        %v359 = vshrl.u32 %v358, 7
        %v360 = vsub.s32 4, %v359
        %v361 = vrot.slane %v284, %v360
        %v362 = vlaneseq
        %v363 = vshrl.u32 %v362, 7
        %v364 = vsub.s32 6, %v363
        %v365 = vrot.slane %v284, %v364
        %v366 = vlaneseq
        %v367 = vshrl.u32 %v366, 7
        %v368 = vsub.s32 0, %v367
        %v369 = vrot.slane %v285, %v368
        %v370 = vlaneseq
        %v371 = vshrl.u32 %v370, 7
        %v372 = vsub.s32 2, %v371
        %v373 = vrot.slane %v285, %v372
        %v374 = vlaneseq
        %v375 = vshrl.u32 %v374, 7
        %v376 = vsub.s32 4, %v375
        %v377 = vrot.slane %v285, %v376
        %v378 = vlaneseq
        %v379 = vshrl.u32 %v378, 7
        %v380 = vsub.s32 6, %v379
        %v381 = vrot.slane %v285, %v380
        %v398 = vlaneseq
        %v399 = vshrl.u32 %v398, 7
        %v400 = vsub.s32 0, %v399
        %v401 = vrot.slane %v321, %v400
        %v402 = vlaneseq
        %v403 = vshrl.u32 %v402, 7
        %v404 = vsub.s32 0, %v403
        %v405 = vrot.slane %v325, %v404
        %v406 = vlaneseq
        %v407 = vshrl.u32 %v406, 7
        %v408 = vsub.s32 0, %v407
        %v409 = vrot.slane %v329, %v408
        %v410 = vlaneseq
        %v411 = vshrl.u32 %v410, 7
        %v412 = vsub.s32 0, %v411
        %v413 = vrot.slane %v333, %v412
        %v414 = vlaneseq
        %v415 = vshrl.u32 %v414, 7
        %v416 = vsub.s32 0, %v415
        %v417 = vrot.slane %v337, %v416
        %v418 = vlaneseq
        %v419 = vshrl.u32 %v418, 7
        %v420 = vsub.s32 0, %v419
        %v421 = vrot.slane %v341, %v420
        %v422 = vlaneseq
        %v423 = vshrl.u32 %v422, 7
        %v424 = vsub.s32 0, %v423
        %v425 = vrot.slane %v345, %v424
        %v426 = vlaneseq
        %v427 = vshrl.u32 %v426, 7
        %v428 = vsub.s32 0, %v427
        %v429 = vrot.slane %v349, %v428
        %v430 = vlaneseq
        %v431 = vshrl.u32 %v430, 7
        %v432 = vsub.s32 0, %v431
        %v433 = vrot.slane %v353, %v432
        %v434 = vlaneseq
        %v435 = vshrl.u32 %v434, 7
        %v436 = vsub.s32 0, %v435
        %v437 = vrot.slane %v357, %v436
        %v438 = vlaneseq
        %v439 = vshrl.u32 %v438, 7
        %v440 = vsub.s32 0, %v439
        %v441 = vrot.slane %v361, %v440
        %v442 = vlaneseq
        %v443 = vshrl.u32 %v442, 7
        %v444 = vsub.s32 0, %v443
        %v445 = vrot.slane %v365, %v444
        %v446 = vlaneseq
        %v447 = vshrl.u32 %v446, 7
        %v448 = vsub.s32 0, %v447
        %v449 = vrot.slane %v369, %v448
        %v450 = vlaneseq
        %v451 = vshrl.u32 %v450, 7
        %v452 = vsub.s32 0, %v451
        %v453 = vrot.slane %v373, %v452
        %v454 = vlaneseq
        %v455 = vshrl.u32 %v454, 7
        %v456 = vsub.s32 0, %v455
        %v457 = vrot.slane %v377, %v456
        %v458 = vlaneseq
        %v459 = vshrl.u32 %v458, 7
        %v460 = vsub.s32 0, %v459
        %v461 = vrot.slane %v381, %v460
        %v462 = vmul.f32 %v297, %v401
        %v463 = vmul.f32 %v297, %v405
        %v464 = vmul.f32 %v297, %v409
        %v465 = vmul.f32 %v297, %v413
        %v466 = vmul.f32 %v297, %v417
        %v467 = vmul.f32 %v297, %v421
        %v468 = vmul.f32 %v297, %v425
        %v469 = vmul.f32 %v297, %v429
        %v470 = vmul.f32 %v297, %v433
        %v471 = vmul.f32 %v297, %v437
        %v472 = vmul.f32 %v297, %v441
        %v473 = vmul.f32 %v297, %v445
        %v474 = vmul.f32 %v297, %v449
        %v475 = vmul.f32 %v297, %v453
        %v476 = vmul.f32 %v297, %v457
        %v477 = vmul.f32 %v297, %v461
        %v478 = vmul.f32 %v302, %v401
        %v479 = vmul.f32 %v302, %v405
        %v480 = vmul.f32 %v302, %v409
        %v481 = vmul.f32 %v302, %v413
        %v482 = vmul.f32 %v302, %v417
        %v483 = vmul.f32 %v302, %v421
        %v484 = vmul.f32 %v302, %v425
        %v485 = vmul.f32 %v302, %v429
        %v486 = vmul.f32 %v302, %v433
        %v487 = vmul.f32 %v302, %v437
        %v488 = vmul.f32 %v302, %v441
        %v489 = vmul.f32 %v302, %v445
        %v490 = vmul.f32 %v302, %v449
        %v491 = vmul.f32 %v302, %v453
        %v492 = vmul.f32 %v302, %v457
        %v493 = vmul.f32 %v302, %v461
        %v494 = vmul.f32 %v307, %v401
        %v495 = vmul.f32 %v307, %v405
        %v496 = vmul.f32 %v307, %v409
        %v497 = vmul.f32 %v307, %v413
        %v498 = vmul.f32 %v307, %v417
        %v499 = vmul.f32 %v307, %v421
        %v500 = vmul.f32 %v307, %v425
        %v501 = vmul.f32 %v307, %v429
        %v502 = vmul.f32 %v307, %v433
        %v503 = vmul.f32 %v307, %v437
        %v504 = vmul.f32 %v307, %v441
        %v505 = vmul.f32 %v307, %v445
        %v506 = vmul.f32 %v307, %v449
        %v507 = vmul.f32 %v307, %v453
        %v508 = vmul.f32 %v307, %v457
        %v509 = vmul.f32 %v307, %v461
        %v510 = vmul.f32 %v312, %v401
        %v511 = vmul.f32 %v312, %v405
        %v512 = vmul.f32 %v312, %v409
        %v513 = vmul.f32 %v312, %v413
        %v514 = vmul.f32 %v312, %v417
        %v515 = vmul.f32 %v312, %v421
        %v516 = vmul.f32 %v312, %v425
        %v517 = vmul.f32 %v312, %v429
        %v518 = vmul.f32 %v312, %v433
        %v519 = vmul.f32 %v312, %v437
        %v520 = vmul.f32 %v312, %v441
        %v521 = vmul.f32 %v312, %v445
        %v522 = vmul.f32 %v312, %v449
        %v523 = vmul.f32 %v312, %v453
        %v524 = vmul.f32 %v312, %v457
        %v525 = vmul.f32 %v312, %v461
        %527 = vset.pattern.permute.xlu0 0
        %528 = vperm.xlu0 %527, %v290
        %v529 = vpop.permute.xlu0 %528
        %532 = vset.pattern.permute.xlu0 0
        %533 = vperm.xlu0 %532, %v291
        %v534 = vpop.permute.xlu0 %533
        %537 = vset.pattern.permute.xlu0 0
        %538 = vperm.xlu0 %537, %v292
        %v539 = vpop.permute.xlu0 %538
        %542 = vset.pattern.permute.xlu0 0
        %543 = vperm.xlu0 %542, %v293
        %v544 = vpop.permute.xlu0 %543
        %v546 = vadd.f32 %v529, %v462
        %v547 = vadd.f32 %v529, %v463
        %v548 = vadd.f32 %v529, %v464
        %v549 = vadd.f32 %v529, %v465
        %v550 = vadd.f32 %v529, %v466
        %v551 = vadd.f32 %v529, %v467
        %v552 = vadd.f32 %v529, %v468
        %v553 = vadd.f32 %v529, %v469
        %v554 = vadd.f32 %v529, %v470
        %v555 = vadd.f32 %v529, %v471
        %v556 = vadd.f32 %v529, %v472
        %v557 = vadd.f32 %v529, %v473
        %v558 = vadd.f32 %v529, %v474
        %v559 = vadd.f32 %v529, %v475
        %v560 = vadd.f32 %v529, %v476
        %v561 = vadd.f32 %v529, %v477
        %v562 = vadd.f32 %v534, %v478
        %v563 = vadd.f32 %v534, %v479
        %v564 = vadd.f32 %v534, %v480
        %v565 = vadd.f32 %v534, %v481
        %v566 = vadd.f32 %v534, %v482
        %v567 = vadd.f32 %v534, %v483
        %v568 = vadd.f32 %v534, %v484
        %v569 = vadd.f32 %v534, %v485
        %v570 = vadd.f32 %v534, %v486
        %v571 = vadd.f32 %v534, %v487
        %v572 = vadd.f32 %v534, %v488
        %v573 = vadd.f32 %v534, %v489
        %v574 = vadd.f32 %v534, %v490
        %v575 = vadd.f32 %v534, %v491
        %v576 = vadd.f32 %v534, %v492
        %v577 = vadd.f32 %v534, %v493
        %v578 = vadd.f32 %v539, %v494
        %v579 = vadd.f32 %v539, %v495
        %v580 = vadd.f32 %v539, %v496
        %v581 = vadd.f32 %v539, %v497
        %v582 = vadd.f32 %v539, %v498
        %v583 = vadd.f32 %v539, %v499
        %v584 = vadd.f32 %v539, %v500
        %v585 = vadd.f32 %v539, %v501
        %v586 = vadd.f32 %v539, %v502
        %v587 = vadd.f32 %v539, %v503
        %v588 = vadd.f32 %v539, %v504
        %v589 = vadd.f32 %v539, %v505
        %v590 = vadd.f32 %v539, %v506
        %v591 = vadd.f32 %v539, %v507
        %v592 = vadd.f32 %v539, %v508
        %v593 = vadd.f32 %v539, %v509
        %v594 = vadd.f32 %v544, %v510
        %v595 = vadd.f32 %v544, %v511
        %v596 = vadd.f32 %v544, %v512
        %v597 = vadd.f32 %v544, %v513
        %v598 = vadd.f32 %v544, %v514
        %v599 = vadd.f32 %v544, %v515
        %v600 = vadd.f32 %v544, %v516
        %v601 = vadd.f32 %v544, %v517
        %v602 = vadd.f32 %v544, %v518
        %v603 = vadd.f32 %v544, %v519
        %v604 = vadd.f32 %v544, %v520
        %v605 = vadd.f32 %v544, %v521
        %v606 = vadd.f32 %v544, %v522
        %v607 = vadd.f32 %v544, %v523
        %v608 = vadd.f32 %v544, %v524
        %v609 = vadd.f32 %v544, %v525
        %610 = vset.pattern.permute.xlu0 1
        %611 = vperm.xlu0 %610, %v286
        %v612 = vpop.permute.xlu0 %611
        %614 = vset.pattern.permute.xlu0 1
        %615 = vperm.xlu0 %614, %v287
        %v616 = vpop.permute.xlu0 %615
        %618 = vset.pattern.permute.xlu0 1
        %619 = vperm.xlu0 %618, %v288
        %v620 = vpop.permute.xlu0 %619
        %622 = vset.pattern.permute.xlu0 1
        %623 = vperm.xlu0 %622, %v289
        %v624 = vpop.permute.xlu0 %623
        %v626 = vlaneseq
        %v627 = vshrl.u32 %v626, 7
        %v628 = vsub.s32 1, %v627
        %v629 = vrot.slane %v282, %v628
        %v630 = vlaneseq
        %v631 = vshrl.u32 %v630, 7
        %v632 = vsub.s32 3, %v631
        %v633 = vrot.slane %v282, %v632
        %v634 = vlaneseq
        %v635 = vshrl.u32 %v634, 7
        %v636 = vsub.s32 5, %v635
        %v637 = vrot.slane %v282, %v636
        %v638 = vlaneseq
        %v639 = vshrl.u32 %v638, 7
        %v640 = vsub.s32 7, %v639
        %v641 = vrot.slane %v282, %v640
        %v642 = vlaneseq
        %v643 = vshrl.u32 %v642, 7
        %v644 = vsub.s32 1, %v643
        %v645 = vrot.slane %v283, %v644
        %v646 = vlaneseq
        %v647 = vshrl.u32 %v646, 7
        %v648 = vsub.s32 3, %v647
        %v649 = vrot.slane %v283, %v648
        %v650 = vlaneseq
        %v651 = vshrl.u32 %v650, 7
        %v652 = vsub.s32 5, %v651
        %v653 = vrot.slane %v283, %v652
        %v654 = vlaneseq
        %v655 = vshrl.u32 %v654, 7
        %v656 = vsub.s32 7, %v655
        %v657 = vrot.slane %v283, %v656
        %v658 = vlaneseq
        %v659 = vshrl.u32 %v658, 7
        %v660 = vsub.s32 1, %v659
        %v661 = vrot.slane %v284, %v660
        %v662 = vlaneseq
        %v663 = vshrl.u32 %v662, 7
        %v664 = vsub.s32 3, %v663
        %v665 = vrot.slane %v284, %v664
        %v666 = vlaneseq
        %v667 = vshrl.u32 %v666, 7
        %v668 = vsub.s32 5, %v667
        %v669 = vrot.slane %v284, %v668
        %v670 = vlaneseq
        %v671 = vshrl.u32 %v670, 7
        %v672 = vsub.s32 7, %v671
        %v673 = vrot.slane %v284, %v672
        %v674 = vlaneseq
        %v675 = vshrl.u32 %v674, 7
        %v676 = vsub.s32 1, %v675
        %v677 = vrot.slane %v285, %v676
        %v678 = vlaneseq
        %v679 = vshrl.u32 %v678, 7
        %v680 = vsub.s32 3, %v679
        %v681 = vrot.slane %v285, %v680
        %v682 = vlaneseq
        %v683 = vshrl.u32 %v682, 7
        %v684 = vsub.s32 5, %v683
        %v685 = vrot.slane %v285, %v684
        %v686 = vlaneseq
        %v687 = vshrl.u32 %v686, 7
        %v688 = vsub.s32 7, %v687
        %v689 = vrot.slane %v285, %v688
        %v706 = vlaneseq
        %v707 = vshrl.u32 %v706, 7
        %v708 = vsub.s32 1, %v707
        %v709 = vrot.slane %v629, %v708
        %v710 = vlaneseq
        %v711 = vshrl.u32 %v710, 7
        %v712 = vsub.s32 1, %v711
        %v713 = vrot.slane %v633, %v712
        %v714 = vlaneseq
        %v715 = vshrl.u32 %v714, 7
        %v716 = vsub.s32 1, %v715
        %v717 = vrot.slane %v637, %v716
        %v718 = vlaneseq
        %v719 = vshrl.u32 %v718, 7
        %v720 = vsub.s32 1, %v719
        %v721 = vrot.slane %v641, %v720
        %v722 = vlaneseq
        %v723 = vshrl.u32 %v722, 7
        %v724 = vsub.s32 1, %v723
        %v725 = vrot.slane %v645, %v724
        %v726 = vlaneseq
        %v727 = vshrl.u32 %v726, 7
        %v728 = vsub.s32 1, %v727
        %v729 = vrot.slane %v649, %v728
        %v730 = vlaneseq
        %v731 = vshrl.u32 %v730, 7
        %v732 = vsub.s32 1, %v731
        %v733 = vrot.slane %v653, %v732
        %v734 = vlaneseq
        %v735 = vshrl.u32 %v734, 7
        %v736 = vsub.s32 1, %v735
        %v737 = vrot.slane %v657, %v736
        %v738 = vlaneseq
        %v739 = vshrl.u32 %v738, 7
        %v740 = vsub.s32 1, %v739
        %v741 = vrot.slane %v661, %v740
        %v742 = vlaneseq
        %v743 = vshrl.u32 %v742, 7
        %v744 = vsub.s32 1, %v743
        %v745 = vrot.slane %v665, %v744
        %v746 = vlaneseq
        %v747 = vshrl.u32 %v746, 7
        %v748 = vsub.s32 1, %v747
        %v749 = vrot.slane %v669, %v748
        %v750 = vlaneseq
        %v751 = vshrl.u32 %v750, 7
        %v752 = vsub.s32 1, %v751
        %v753 = vrot.slane %v673, %v752
        %v754 = vlaneseq
        %v755 = vshrl.u32 %v754, 7
        %v756 = vsub.s32 1, %v755
        %v757 = vrot.slane %v677, %v756
        %v758 = vlaneseq
        %v759 = vshrl.u32 %v758, 7
        %v760 = vsub.s32 1, %v759
        %v761 = vrot.slane %v681, %v760
        %v762 = vlaneseq
        %v763 = vshrl.u32 %v762, 7
        %v764 = vsub.s32 1, %v763
        %v765 = vrot.slane %v685, %v764
        %v766 = vlaneseq
        %v767 = vshrl.u32 %v766, 7
        %v768 = vsub.s32 1, %v767
        %v769 = vrot.slane %v689, %v768
        %v770 = vmul.f32 %v612, %v709
        %v771 = vmul.f32 %v612, %v713
        %v772 = vmul.f32 %v612, %v717
        %v773 = vmul.f32 %v612, %v721
        %v774 = vmul.f32 %v612, %v725
        %v775 = vmul.f32 %v612, %v729
        %v776 = vmul.f32 %v612, %v733
        %v777 = vmul.f32 %v612, %v737
        %v778 = vmul.f32 %v612, %v741
        %v779 = vmul.f32 %v612, %v745
        %v780 = vmul.f32 %v612, %v749
        %v781 = vmul.f32 %v612, %v753
        %v782 = vmul.f32 %v612, %v757
        %v783 = vmul.f32 %v612, %v761
        %v784 = vmul.f32 %v612, %v765
        %v785 = vmul.f32 %v612, %v769
        %v786 = vmul.f32 %v616, %v709
        %v787 = vmul.f32 %v616, %v713
        %v788 = vmul.f32 %v616, %v717
        %v789 = vmul.f32 %v616, %v721
        %v790 = vmul.f32 %v616, %v725
        %v791 = vmul.f32 %v616, %v729
        %v792 = vmul.f32 %v616, %v733
        %v793 = vmul.f32 %v616, %v737
        %v794 = vmul.f32 %v616, %v741
        %v795 = vmul.f32 %v616, %v745
        %v796 = vmul.f32 %v616, %v749
        %v797 = vmul.f32 %v616, %v753
        %v798 = vmul.f32 %v616, %v757
        %v799 = vmul.f32 %v616, %v761
        %v800 = vmul.f32 %v616, %v765
        %v801 = vmul.f32 %v616, %v769
        %v802 = vmul.f32 %v620, %v709
        %v803 = vmul.f32 %v620, %v713
        %v804 = vmul.f32 %v620, %v717
        %v805 = vmul.f32 %v620, %v721
        %v806 = vmul.f32 %v620, %v725
        %v807 = vmul.f32 %v620, %v729
        %v808 = vmul.f32 %v620, %v733
        %v809 = vmul.f32 %v620, %v737
        %v810 = vmul.f32 %v620, %v741
        %v811 = vmul.f32 %v620, %v745
        %v812 = vmul.f32 %v620, %v749
        %v813 = vmul.f32 %v620, %v753
        %v814 = vmul.f32 %v620, %v757
        %v815 = vmul.f32 %v620, %v761
        %v816 = vmul.f32 %v620, %v765
        %v817 = vmul.f32 %v620, %v769
        %v818 = vmul.f32 %v624, %v709
        %v819 = vmul.f32 %v624, %v713
        %v820 = vmul.f32 %v624, %v717
        %v821 = vmul.f32 %v624, %v721
        %v822 = vmul.f32 %v624, %v725
        %v823 = vmul.f32 %v624, %v729
        %v824 = vmul.f32 %v624, %v733
        %v825 = vmul.f32 %v624, %v737
        %v826 = vmul.f32 %v624, %v741
        %v827 = vmul.f32 %v624, %v745
        %v828 = vmul.f32 %v624, %v749
        %v829 = vmul.f32 %v624, %v753
        %v830 = vmul.f32 %v624, %v757
        %v831 = vmul.f32 %v624, %v761
        %v832 = vmul.f32 %v624, %v765
        %v833 = vmul.f32 %v624, %v769
        %v834 = vadd.f32 %v546, %v770
        %v835 = vadd.f32 %v547, %v771
        %v836 = vadd.f32 %v548, %v772
        %v837 = vadd.f32 %v549, %v773
        %v838 = vadd.f32 %v550, %v774
        %v839 = vadd.f32 %v551, %v775
        %v840 = vadd.f32 %v552, %v776
        %v841 = vadd.f32 %v553, %v777
        %v842 = vadd.f32 %v554, %v778
        %v843 = vadd.f32 %v555, %v779
        %v844 = vadd.f32 %v556, %v780
        %v845 = vadd.f32 %v557, %v781
        %v846 = vadd.f32 %v558, %v782
        %v847 = vadd.f32 %v559, %v783
        %v848 = vadd.f32 %v560, %v784
        %v849 = vadd.f32 %v561, %v785
        %v850 = vadd.f32 %v562, %v786
        %v851 = vadd.f32 %v563, %v787
        %v852 = vadd.f32 %v564, %v788
        %v853 = vadd.f32 %v565, %v789
        %v854 = vadd.f32 %v566, %v790
        %v855 = vadd.f32 %v567, %v791
        %v856 = vadd.f32 %v568, %v792
        %v857 = vadd.f32 %v569, %v793
        %v858 = vadd.f32 %v570, %v794
        %v859 = vadd.f32 %v571, %v795
        %v860 = vadd.f32 %v572, %v796
        %v861 = vadd.f32 %v573, %v797
        %v862 = vadd.f32 %v574, %v798
        %v863 = vadd.f32 %v575, %v799
        %v864 = vadd.f32 %v576, %v800
        %v865 = vadd.f32 %v577, %v801
        %v866 = vadd.f32 %v578, %v802
        %v867 = vadd.f32 %v579, %v803
        %v868 = vadd.f32 %v580, %v804
        %v869 = vadd.f32 %v581, %v805
        %v870 = vadd.f32 %v582, %v806
        %v871 = vadd.f32 %v583, %v807
        %v872 = vadd.f32 %v584, %v808
        %v873 = vadd.f32 %v585, %v809
        %v874 = vadd.f32 %v586, %v810
        %v875 = vadd.f32 %v587, %v811
        %v876 = vadd.f32 %v588, %v812
        %v877 = vadd.f32 %v589, %v813
        %v878 = vadd.f32 %v590, %v814
        %v879 = vadd.f32 %v591, %v815
        %v880 = vadd.f32 %v592, %v816
        %v881 = vadd.f32 %v593, %v817
        %v882 = vadd.f32 %v594, %v818
        %v883 = vadd.f32 %v595, %v819
        %v884 = vadd.f32 %v596, %v820
        %v885 = vadd.f32 %v597, %v821
        %v886 = vadd.f32 %v598, %v822
        %v887 = vadd.f32 %v599, %v823
        %v888 = vadd.f32 %v600, %v824
        %v889 = vadd.f32 %v601, %v825
        %v890 = vadd.f32 %v602, %v826
        %v891 = vadd.f32 %v603, %v827
        %v892 = vadd.f32 %v604, %v828
        %v893 = vadd.f32 %v605, %v829
        %v894 = vadd.f32 %v606, %v830
        %v895 = vadd.f32 %v607, %v831
        %v896 = vadd.f32 %v608, %v832
        %v897 = vadd.f32 %v609, %v833
        %v898 = vtanh.pop %v834
        %v899 = vtanh.pop %v835
        %v900 = vtanh.pop %v836
        %v901 = vtanh.pop %v837
        %v902 = vtanh.pop %v838
        %v903 = vtanh.pop %v839
        %v904 = vtanh.pop %v840
        %v905 = vtanh.pop %v841
        %v906 = vtanh.pop %v842
        %v907 = vtanh.pop %v843
        %v908 = vtanh.pop %v844
        %v909 = vtanh.pop %v845
        %v910 = vtanh.pop %v846
        %v911 = vtanh.pop %v847
        %v912 = vtanh.pop %v848
        %v913 = vtanh.pop %v849
        %v914 = vtanh.pop %v850
        %v915 = vtanh.pop %v851
        %v916 = vtanh.pop %v852
        %v917 = vtanh.pop %v853
        %v918 = vtanh.pop %v854
        %v919 = vtanh.pop %v855
        %v920 = vtanh.pop %v856
        %v921 = vtanh.pop %v857
        %v922 = vtanh.pop %v858
        %v923 = vtanh.pop %v859
        %v924 = vtanh.pop %v860
        %v925 = vtanh.pop %v861
        %v926 = vtanh.pop %v862
        %v927 = vtanh.pop %v863
        %v928 = vtanh.pop %v864
        %v929 = vtanh.pop %v865
        %v930 = vtanh.pop %v866
        %v931 = vtanh.pop %v867
        %v932 = vtanh.pop %v868
        %v933 = vtanh.pop %v869
        %v934 = vtanh.pop %v870
        %v935 = vtanh.pop %v871
        %v936 = vtanh.pop %v872
        %v937 = vtanh.pop %v873
        %v938 = vtanh.pop %v874
        %v939 = vtanh.pop %v875
        %v940 = vtanh.pop %v876
        %v941 = vtanh.pop %v877
        %v942 = vtanh.pop %v878
        %v943 = vtanh.pop %v879
        %v944 = vtanh.pop %v880
        %v945 = vtanh.pop %v881
        %v946 = vtanh.pop %v882
        %v947 = vtanh.pop %v883
        %v948 = vtanh.pop %v884
        %v949 = vtanh.pop %v885
        %v950 = vtanh.pop %v886
        %v951 = vtanh.pop %v887
        %v952 = vtanh.pop %v888
        %v953 = vtanh.pop %v889
        %v954 = vtanh.pop %v890
        %v955 = vtanh.pop %v891
        %v956 = vtanh.pop %v892
        %v957 = vtanh.pop %v893
        %v958 = vtanh.pop %v894
        %v959 = vtanh.pop %v895
        %v960 = vtanh.pop %v896
        %v961 = vtanh.pop %v897
        %v962 = vld [vmem:[%s3] sm:$0xff]
        %v963 = vld [vmem:[%s3 + $0x8] sm:$0xff]
        %v964 = vld [vmem:[%s3 + $0x10] sm:$0xff]
        %v965 = vld [vmem:[%s3 + $0x18] sm:$0xff]
        %v966 = vld [vmem:[%s4] sm:$0xff]
        %v967 = vld [vmem:[%s4 + $0x8] sm:$0xff]
        %v968 = vld [vmem:[%s4 + $0x10] sm:$0xff]
        %v969 = vld [vmem:[%s4 + $0x18] sm:$0xff]
        %971 = vset.pattern.permute.xlu0 0
        %972 = vperm.xlu0 %971, %v966
        %v973 = vpop.permute.xlu0 %972
        %976 = vset.pattern.permute.xlu0 0
        %977 = vperm.xlu0 %976, %v967
        %v978 = vpop.permute.xlu0 %977
        %981 = vset.pattern.permute.xlu0 0
        %982 = vperm.xlu0 %981, %v968
        %v983 = vpop.permute.xlu0 %982
        %986 = vset.pattern.permute.xlu0 0
        %987 = vperm.xlu0 %986, %v969
        %v988 = vpop.permute.xlu0 %987
        %vm990 = vcmask 261120
        %v992 = vsel %vm990, %v962, 0
        %v995 = vsel %vm990, %v963, 0
        %v998 = vsel %vm990, %v964, 0
        %v1001 = vsel %vm990, %v965, 0
        %1003 = vmatprep.subr.mxu0 0.0
        %1004 = vmatpush1.msra.mxu0 0.0
        %1005 = vmatprep.subr.mxu0 0.0
        %1006 = vmatpush1.msra.mxu0 0.0
        %1007 = vmatprep.subr.mxu0 0.0
        %1008 = vmatpush1.msra.mxu0 0.0
        %1009 = vmatprep.subr.mxu0 0.0
        %1010 = vmatpush1.msra.mxu0 0.0
        %1011 = vmatprep.subr.mxu0 0.0
        %1012 = vmatpush1.msra.mxu0 0.0
        %1013 = vmatprep.subr.mxu0 0.0
        %1014 = vmatpush1.msra.mxu0 0.0
        %1015 = vmatprep.subr.mxu0 0.0
        %1016 = vmatpush1.msra.mxu0 0.0
        %1017 = vmatprep.subr.mxu0 0.0
        %1018 = vmatpush1.msra.mxu0 0.0
        %1019 = vmatprep.subr.mxu0 0.0
        %1020 = vmatpush1.msra.mxu0 0.0
        %1021 = vmatprep.subr.mxu0 0.0
        %1022 = vmatpush1.msra.mxu0 0.0
        %1023 = vmatprep.subr.mxu0 0.0
        %1024 = vmatpush1.msra.mxu0 0.0
        %1025 = vmatprep.subr.mxu0 0.0
        %1026 = vmatpush1.msra.mxu0 0.0
        %1027 = vmatprep.subr.mxu0 %v947
        %1028 = vmatpush1.msra.mxu0 %v946
        %1029 = vmatprep.subr.mxu0 %v931
        %1030 = vmatpush1.msra.mxu0 %v930
        %1031 = vmatprep.subr.mxu0 %v915
        %1032 = vmatpush1.msra.mxu0 %v914
        %1033 = vmatprep.subr.mxu0 %v899
        %1034 = vmatpush1.msra.mxu0 %v898
        %1035 = vmatprep.subr.mxu0 0.0
        %1036 = vmatpush2.msra.mxu0 0.0
        %1037 = vmatprep.subr.mxu0 0.0
        %1038 = vmatpush2.msra.mxu0 0.0
        %1039 = vmatprep.subr.mxu0 0.0
        %1040 = vmatpush2.msra.mxu0 0.0
        %1041 = vmatprep.subr.mxu0 0.0
        %1042 = vmatpush2.msra.mxu0 0.0
        %1043 = vmatprep.subr.mxu0 0.0
        %1044 = vmatpush2.msra.mxu0 0.0
        %1045 = vmatprep.subr.mxu0 0.0
        %1046 = vmatpush2.msra.mxu0 0.0
        %1047 = vmatprep.subr.mxu0 0.0
        %1048 = vmatpush2.msra.mxu0 0.0
        %1049 = vmatprep.subr.mxu0 0.0
        %1050 = vmatpush2.msra.mxu0 0.0
        %1051 = vmatprep.subr.mxu0 0.0
        %1052 = vmatpush2.msra.mxu0 0.0
        %1053 = vmatprep.subr.mxu0 0.0
        %1054 = vmatpush2.msra.mxu0 0.0
        %1055 = vmatprep.subr.mxu0 0.0
        %1056 = vmatpush2.msra.mxu0 0.0
        %1057 = vmatprep.subr.mxu0 0.0
        %1058 = vmatpush2.msra.mxu0 0.0
        %1059 = vmatprep.subr.mxu0 0.0
        %1060 = vmatpush2.msra.mxu0 0.0
        %1061 = vmatprep.subr.mxu0 0.0
        %1062 = vmatpush2.msra.mxu0 0.0
        %1063 = vmatprep.subr.mxu0 0.0
        %1064 = vmatpush2.msra.mxu0 0.0
        %1065 = vmatprep.subr.mxu0 0.0
        %1066 = vmatpush2.msra.mxu0 0.0
        %1067 = vmatprep.mubr.f32.mxu0 0.0
        %1068 = vmatmul.mubr.f32.gmra.mxu0 %v992
        %v1069 = vpop.f32.mrf.mxu0
        %v1070 = vadd.f32 %v973, %v1069
        %v1071 = vpop.f32.mrf.mxu0
        %v1072 = vadd.f32 %v973, %v1071
        %1073 = vmatprep.mubr.f32.mxu0 0.0
        %1074 = vmatmul.mubr.f32.gmra.mxu0 %v995
        %v1075 = vpop.f32.mrf.mxu0
        %v1076 = vadd.f32 %v978, %v1075
        %v1077 = vpop.f32.mrf.mxu0
        %v1078 = vadd.f32 %v978, %v1077
        %1079 = vmatprep.mubr.f32.mxu0 0.0
        %1080 = vmatmul.mubr.f32.gmra.mxu0 %v998
        %v1081 = vpop.f32.mrf.mxu0
        %v1082 = vadd.f32 %v983, %v1081
        %v1083 = vpop.f32.mrf.mxu0
        %v1084 = vadd.f32 %v983, %v1083
        %1085 = vmatprep.mubr.f32.mxu0 0.0
        %1086 = vmatmul.mubr.f32.gmra.mxu0 %v1001
        %v1087 = vpop.f32.mrf.mxu0
        %v1088 = vadd.f32 %v988, %v1087
        %v1089 = vpop.f32.mrf.mxu0
        %v1090 = vadd.f32 %v988, %v1089
        %1091 = vdwg.mxu0
        %1092 = vmatprep.subr.mxu0 0.0
        %1093 = vmatpush1.msra.mxu0 0.0
        %1094 = vmatprep.subr.mxu0 0.0
        %1095 = vmatpush1.msra.mxu0 0.0
        %1096 = vmatprep.subr.mxu0 0.0
        %1097 = vmatpush1.msra.mxu0 0.0
        %1098 = vmatprep.subr.mxu0 0.0
        %1099 = vmatpush1.msra.mxu0 0.0
        %1100 = vmatprep.subr.mxu0 0.0
        %1101 = vmatpush1.msra.mxu0 0.0
        %1102 = vmatprep.subr.mxu0 0.0
        %1103 = vmatpush1.msra.mxu0 0.0
        %1104 = vmatprep.subr.mxu0 0.0
        %1105 = vmatpush1.msra.mxu0 0.0
        %1106 = vmatprep.subr.mxu0 0.0
        %1107 = vmatpush1.msra.mxu0 0.0
        %1108 = vmatprep.subr.mxu0 0.0
        %1109 = vmatpush1.msra.mxu0 0.0
        %1110 = vmatprep.subr.mxu0 0.0
        %1111 = vmatpush1.msra.mxu0 0.0
        %1112 = vmatprep.subr.mxu0 0.0
        %1113 = vmatpush1.msra.mxu0 0.0
        %1114 = vmatprep.subr.mxu0 0.0
        %1115 = vmatpush1.msra.mxu0 0.0
        %1116 = vmatprep.subr.mxu0 %v949
        %1117 = vmatpush1.msra.mxu0 %v948
        %1118 = vmatprep.subr.mxu0 %v933
        %1119 = vmatpush1.msra.mxu0 %v932
        %1120 = vmatprep.subr.mxu0 %v917
        %1121 = vmatpush1.msra.mxu0 %v916
        %1122 = vmatprep.subr.mxu0 %v901
        %1123 = vmatpush1.msra.mxu0 %v900
        %1124 = vmatprep.subr.mxu0 0.0
        %1125 = vmatpush2.msra.mxu0 0.0
        %1126 = vmatprep.subr.mxu0 0.0
        %1127 = vmatpush2.msra.mxu0 0.0
        %1128 = vmatprep.subr.mxu0 0.0
        %1129 = vmatpush2.msra.mxu0 0.0
        %1130 = vmatprep.subr.mxu0 0.0
        %1131 = vmatpush2.msra.mxu0 0.0
        %1132 = vmatprep.subr.mxu0 0.0
        %1133 = vmatpush2.msra.mxu0 0.0
        %1134 = vmatprep.subr.mxu0 0.0
        %1135 = vmatpush2.msra.mxu0 0.0
        %1136 = vmatprep.subr.mxu0 0.0
        %1137 = vmatpush2.msra.mxu0 0.0
        %1138 = vmatprep.subr.mxu0 0.0
        %1139 = vmatpush2.msra.mxu0 0.0
        %1140 = vmatprep.subr.mxu0 0.0
        %1141 = vmatpush2.msra.mxu0 0.0
        %1142 = vmatprep.subr.mxu0 0.0
        %1143 = vmatpush2.msra.mxu0 0.0
        %1144 = vmatprep.subr.mxu0 0.0
        %1145 = vmatpush2.msra.mxu0 0.0
        %1146 = vmatprep.subr.mxu0 0.0
        %1147 = vmatpush2.msra.mxu0 0.0
        %1148 = vmatprep.subr.mxu0 0.0
        %1149 = vmatpush2.msra.mxu0 0.0
        %1150 = vmatprep.subr.mxu0 0.0
        %1151 = vmatpush2.msra.mxu0 0.0
        %1152 = vmatprep.subr.mxu0 0.0
        %1153 = vmatpush2.msra.mxu0 0.0
        %1154 = vmatprep.subr.mxu0 0.0
        %1155 = vmatpush2.msra.mxu0 0.0
        %1156 = vmatprep.mubr.f32.mxu0 0.0
        %1157 = vmatmul.mubr.f32.gmra.mxu0 %v992
        %v1158 = vpop.f32.mrf.mxu0
        %v1159 = vadd.f32 %v973, %v1158
        %v1160 = vpop.f32.mrf.mxu0
        %v1161 = vadd.f32 %v973, %v1160
        %1162 = vmatprep.mubr.f32.mxu0 0.0
        %1163 = vmatmul.mubr.f32.gmra.mxu0 %v995
        %v1164 = vpop.f32.mrf.mxu0
        %v1165 = vadd.f32 %v978, %v1164
        %v1166 = vpop.f32.mrf.mxu0
        %v1167 = vadd.f32 %v978, %v1166
        %1168 = vmatprep.mubr.f32.mxu0 0.0
        %1169 = vmatmul.mubr.f32.gmra.mxu0 %v998
        %v1170 = vpop.f32.mrf.mxu0
        %v1171 = vadd.f32 %v983, %v1170
        %v1172 = vpop.f32.mrf.mxu0
        %v1173 = vadd.f32 %v983, %v1172
        %1174 = vmatprep.mubr.f32.mxu0 0.0
        %1175 = vmatmul.mubr.f32.gmra.mxu0 %v1001
        %v1176 = vpop.f32.mrf.mxu0
        %v1177 = vadd.f32 %v988, %v1176
        %v1178 = vpop.f32.mrf.mxu0
        %v1179 = vadd.f32 %v988, %v1178
        %1180 = vdwg.mxu0
        %1181 = vmatprep.subr.mxu0 0.0
        %1182 = vmatpush1.msra.mxu0 0.0
        %1183 = vmatprep.subr.mxu0 0.0
        %1184 = vmatpush1.msra.mxu0 0.0
        %1185 = vmatprep.subr.mxu0 0.0
        %1186 = vmatpush1.msra.mxu0 0.0
        %1187 = vmatprep.subr.mxu0 0.0
        %1188 = vmatpush1.msra.mxu0 0.0
        %1189 = vmatprep.subr.mxu0 0.0
        %1190 = vmatpush1.msra.mxu0 0.0
        %1191 = vmatprep.subr.mxu0 0.0
        %1192 = vmatpush1.msra.mxu0 0.0
        %1193 = vmatprep.subr.mxu0 0.0
        %1194 = vmatpush1.msra.mxu0 0.0
        %1195 = vmatprep.subr.mxu0 0.0
        %1196 = vmatpush1.msra.mxu0 0.0
        %1197 = vmatprep.subr.mxu0 0.0
        %1198 = vmatpush1.msra.mxu0 0.0
        %1199 = vmatprep.subr.mxu0 0.0
        %1200 = vmatpush1.msra.mxu0 0.0
        %1201 = vmatprep.subr.mxu0 0.0
        %1202 = vmatpush1.msra.mxu0 0.0
        %1203 = vmatprep.subr.mxu0 0.0
        %1204 = vmatpush1.msra.mxu0 0.0
        %1205 = vmatprep.subr.mxu0 %v951
        %1206 = vmatpush1.msra.mxu0 %v950
        %1207 = vmatprep.subr.mxu0 %v935
        %1208 = vmatpush1.msra.mxu0 %v934
        %1209 = vmatprep.subr.mxu0 %v919
        %1210 = vmatpush1.msra.mxu0 %v918
        %1211 = vmatprep.subr.mxu0 %v903
        %1212 = vmatpush1.msra.mxu0 %v902
        %1213 = vmatprep.subr.mxu0 0.0
        %1214 = vmatpush2.msra.mxu0 0.0
        %1215 = vmatprep.subr.mxu0 0.0
        %1216 = vmatpush2.msra.mxu0 0.0
        %1217 = vmatprep.subr.mxu0 0.0
        %1218 = vmatpush2.msra.mxu0 0.0
        %1219 = vmatprep.subr.mxu0 0.0
        %1220 = vmatpush2.msra.mxu0 0.0
        %1221 = vmatprep.subr.mxu0 0.0
        %1222 = vmatpush2.msra.mxu0 0.0
        %1223 = vmatprep.subr.mxu0 0.0
        %1224 = vmatpush2.msra.mxu0 0.0
        %1225 = vmatprep.subr.mxu0 0.0
        %1226 = vmatpush2.msra.mxu0 0.0
        %1227 = vmatprep.subr.mxu0 0.0
        %1228 = vmatpush2.msra.mxu0 0.0
        %1229 = vmatprep.subr.mxu0 0.0
        %1230 = vmatpush2.msra.mxu0 0.0
        %1231 = vmatprep.subr.mxu0 0.0
        %1232 = vmatpush2.msra.mxu0 0.0
        %1233 = vmatprep.subr.mxu0 0.0
        %1234 = vmatpush2.msra.mxu0 0.0
        %1235 = vmatprep.subr.mxu0 0.0
        %1236 = vmatpush2.msra.mxu0 0.0
        %1237 = vmatprep.subr.mxu0 0.0
        %1238 = vmatpush2.msra.mxu0 0.0
        %1239 = vmatprep.subr.mxu0 0.0
        %1240 = vmatpush2.msra.mxu0 0.0
        %1241 = vmatprep.subr.mxu0 0.0
        %1242 = vmatpush2.msra.mxu0 0.0
        %1243 = vmatprep.subr.mxu0 0.0
        %1244 = vmatpush2.msra.mxu0 0.0
        %1245 = vmatprep.mubr.f32.mxu0 0.0
        %1246 = vmatmul.mubr.f32.gmra.mxu0 %v992
        %v1247 = vpop.f32.mrf.mxu0
        %v1248 = vadd.f32 %v973, %v1247
        %v1249 = vpop.f32.mrf.mxu0
        %v1250 = vadd.f32 %v973, %v1249
        %1251 = vmatprep.mubr.f32.mxu0 0.0
        %1252 = vmatmul.mubr.f32.gmra.mxu0 %v995
        %v1253 = vpop.f32.mrf.mxu0
        %v1254 = vadd.f32 %v978, %v1253
        %v1255 = vpop.f32.mrf.mxu0
        %v1256 = vadd.f32 %v978, %v1255
        %1257 = vmatprep.mubr.f32.mxu0 0.0
        %1258 = vmatmul.mubr.f32.gmra.mxu0 %v998
        %v1259 = vpop.f32.mrf.mxu0
        %v1260 = vadd.f32 %v983, %v1259
        %v1261 = vpop.f32.mrf.mxu0
        %v1262 = vadd.f32 %v983, %v1261
        %1263 = vmatprep.mubr.f32.mxu0 0.0
        %1264 = vmatmul.mubr.f32.gmra.mxu0 %v1001
        %v1265 = vpop.f32.mrf.mxu0
        %v1266 = vadd.f32 %v988, %v1265
        %v1267 = vpop.f32.mrf.mxu0
        %v1268 = vadd.f32 %v988, %v1267
        %1269 = vdwg.mxu0
        %1270 = vmatprep.subr.mxu0 0.0
        %1271 = vmatpush1.msra.mxu0 0.0
        %1272 = vmatprep.subr.mxu0 0.0
        %1273 = vmatpush1.msra.mxu0 0.0
        %1274 = vmatprep.subr.mxu0 0.0
        %1275 = vmatpush1.msra.mxu0 0.0
        %1276 = vmatprep.subr.mxu0 0.0
        %1277 = vmatpush1.msra.mxu0 0.0
        %1278 = vmatprep.subr.mxu0 0.0
        %1279 = vmatpush1.msra.mxu0 0.0
        %1280 = vmatprep.subr.mxu0 0.0
        %1281 = vmatpush1.msra.mxu0 0.0
        %1282 = vmatprep.subr.mxu0 0.0
        %1283 = vmatpush1.msra.mxu0 0.0
        %1284 = vmatprep.subr.mxu0 0.0
        %1285 = vmatpush1.msra.mxu0 0.0
        %1286 = vmatprep.subr.mxu0 0.0
        %1287 = vmatpush1.msra.mxu0 0.0
        %1288 = vmatprep.subr.mxu0 0.0
        %1289 = vmatpush1.msra.mxu0 0.0
        %1290 = vmatprep.subr.mxu0 0.0
        %1291 = vmatpush1.msra.mxu0 0.0
        %1292 = vmatprep.subr.mxu0 0.0
        %1293 = vmatpush1.msra.mxu0 0.0
        %1294 = vmatprep.subr.mxu0 %v953
        %1295 = vmatpush1.msra.mxu0 %v952
        %1296 = vmatprep.subr.mxu0 %v937
        %1297 = vmatpush1.msra.mxu0 %v936
        %1298 = vmatprep.subr.mxu0 %v921
        %1299 = vmatpush1.msra.mxu0 %v920
        %1300 = vmatprep.subr.mxu0 %v905
        %1301 = vmatpush1.msra.mxu0 %v904
        %1302 = vmatprep.subr.mxu0 0.0
        %1303 = vmatpush2.msra.mxu0 0.0
        %1304 = vmatprep.subr.mxu0 0.0
        %1305 = vmatpush2.msra.mxu0 0.0
        %1306 = vmatprep.subr.mxu0 0.0
        %1307 = vmatpush2.msra.mxu0 0.0
        %1308 = vmatprep.subr.mxu0 0.0
        %1309 = vmatpush2.msra.mxu0 0.0
        %1310 = vmatprep.subr.mxu0 0.0
        %1311 = vmatpush2.msra.mxu0 0.0
        %1312 = vmatprep.subr.mxu0 0.0
        %1313 = vmatpush2.msra.mxu0 0.0
        %1314 = vmatprep.subr.mxu0 0.0
        %1315 = vmatpush2.msra.mxu0 0.0
        %1316 = vmatprep.subr.mxu0 0.0
        %1317 = vmatpush2.msra.mxu0 0.0
        %1318 = vmatprep.subr.mxu0 0.0
        %1319 = vmatpush2.msra.mxu0 0.0
        %1320 = vmatprep.subr.mxu0 0.0
        %1321 = vmatpush2.msra.mxu0 0.0
        %1322 = vmatprep.subr.mxu0 0.0
        %1323 = vmatpush2.msra.mxu0 0.0
        %1324 = vmatprep.subr.mxu0 0.0
        %1325 = vmatpush2.msra.mxu0 0.0
        %1326 = vmatprep.subr.mxu0 0.0
        %1327 = vmatpush2.msra.mxu0 0.0
        %1328 = vmatprep.subr.mxu0 0.0
        %1329 = vmatpush2.msra.mxu0 0.0
        %1330 = vmatprep.subr.mxu0 0.0
        %1331 = vmatpush2.msra.mxu0 0.0
        %1332 = vmatprep.subr.mxu0 0.0
        %1333 = vmatpush2.msra.mxu0 0.0
        %1334 = vmatprep.mubr.f32.mxu0 0.0
        %1335 = vmatmul.mubr.f32.gmra.mxu0 %v992
        %v1336 = vpop.f32.mrf.mxu0
        %v1337 = vadd.f32 %v973, %v1336
        %v1338 = vpop.f32.mrf.mxu0
        %v1339 = vadd.f32 %v973, %v1338
        %1340 = vmatprep.mubr.f32.mxu0 0.0
        %1341 = vmatmul.mubr.f32.gmra.mxu0 %v995
        %v1342 = vpop.f32.mrf.mxu0
        %v1343 = vadd.f32 %v978, %v1342
        %v1344 = vpop.f32.mrf.mxu0
        %v1345 = vadd.f32 %v978, %v1344
        %1346 = vmatprep.mubr.f32.mxu0 0.0
        %1347 = vmatmul.mubr.f32.gmra.mxu0 %v998
        %v1348 = vpop.f32.mrf.mxu0
        %v1349 = vadd.f32 %v983, %v1348
        %v1350 = vpop.f32.mrf.mxu0
        %v1351 = vadd.f32 %v983, %v1350
        %1352 = vmatprep.mubr.f32.mxu0 0.0
        %1353 = vmatmul.mubr.f32.gmra.mxu0 %v1001
        %v1354 = vpop.f32.mrf.mxu0
        %v1355 = vadd.f32 %v988, %v1354
        %v1356 = vpop.f32.mrf.mxu0
        %v1357 = vadd.f32 %v988, %v1356
        %1358 = vdwg.mxu0
        %1359 = vmatprep.subr.mxu0 0.0
        %1360 = vmatpush1.msra.mxu0 0.0
        %1361 = vmatprep.subr.mxu0 0.0
        %1362 = vmatpush1.msra.mxu0 0.0
        %1363 = vmatprep.subr.mxu0 0.0
        %1364 = vmatpush1.msra.mxu0 0.0
        %1365 = vmatprep.subr.mxu0 0.0
        %1366 = vmatpush1.msra.mxu0 0.0
        %1367 = vmatprep.subr.mxu0 0.0
        %1368 = vmatpush1.msra.mxu0 0.0
        %1369 = vmatprep.subr.mxu0 0.0
        %1370 = vmatpush1.msra.mxu0 0.0
        %1371 = vmatprep.subr.mxu0 0.0
        %1372 = vmatpush1.msra.mxu0 0.0
        %1373 = vmatprep.subr.mxu0 0.0
        %1374 = vmatpush1.msra.mxu0 0.0
        %1375 = vmatprep.subr.mxu0 0.0
        %1376 = vmatpush1.msra.mxu0 0.0
        %1377 = vmatprep.subr.mxu0 0.0
        %1378 = vmatpush1.msra.mxu0 0.0
        %1379 = vmatprep.subr.mxu0 0.0
        %1380 = vmatpush1.msra.mxu0 0.0
        %1381 = vmatprep.subr.mxu0 0.0
        %1382 = vmatpush1.msra.mxu0 0.0
        %1383 = vmatprep.subr.mxu0 %v955
        %1384 = vmatpush1.msra.mxu0 %v954
        %1385 = vmatprep.subr.mxu0 %v939
        %1386 = vmatpush1.msra.mxu0 %v938
        %1387 = vmatprep.subr.mxu0 %v923
        %1388 = vmatpush1.msra.mxu0 %v922
        %1389 = vmatprep.subr.mxu0 %v907
        %1390 = vmatpush1.msra.mxu0 %v906
        %1391 = vmatprep.subr.mxu0 0.0
        %1392 = vmatpush2.msra.mxu0 0.0
        %1393 = vmatprep.subr.mxu0 0.0
        %1394 = vmatpush2.msra.mxu0 0.0
        %1395 = vmatprep.subr.mxu0 0.0
        %1396 = vmatpush2.msra.mxu0 0.0
        %1397 = vmatprep.subr.mxu0 0.0
        %1398 = vmatpush2.msra.mxu0 0.0
        %1399 = vmatprep.subr.mxu0 0.0
        %1400 = vmatpush2.msra.mxu0 0.0
        %1401 = vmatprep.subr.mxu0 0.0
        %1402 = vmatpush2.msra.mxu0 0.0
        %1403 = vmatprep.subr.mxu0 0.0
        %1404 = vmatpush2.msra.mxu0 0.0
        %1405 = vmatprep.subr.mxu0 0.0
        %1406 = vmatpush2.msra.mxu0 0.0
        %1407 = vmatprep.subr.mxu0 0.0
        %1408 = vmatpush2.msra.mxu0 0.0
        %1409 = vmatprep.subr.mxu0 0.0
        %1410 = vmatpush2.msra.mxu0 0.0
        %1411 = vmatprep.subr.mxu0 0.0
        %1412 = vmatpush2.msra.mxu0 0.0
        %1413 = vmatprep.subr.mxu0 0.0
        %1414 = vmatpush2.msra.mxu0 0.0
        %1415 = vmatprep.subr.mxu0 0.0
        %1416 = vmatpush2.msra.mxu0 0.0
        %1417 = vmatprep.subr.mxu0 0.0
        %1418 = vmatpush2.msra.mxu0 0.0
        %1419 = vmatprep.subr.mxu0 0.0
        %1420 = vmatpush2.msra.mxu0 0.0
        %1421 = vmatprep.subr.mxu0 0.0
        %1422 = vmatpush2.msra.mxu0 0.0
        %1423 = vmatprep.mubr.f32.mxu0 0.0
        %1424 = vmatmul.mubr.f32.gmra.mxu0 %v992
        %v1425 = vpop.f32.mrf.mxu0
        %v1426 = vadd.f32 %v973, %v1425
        %v1427 = vpop.f32.mrf.mxu0
        %v1428 = vadd.f32 %v973, %v1427
        %1429 = vmatprep.mubr.f32.mxu0 0.0
        %1430 = vmatmul.mubr.f32.gmra.mxu0 %v995
        %v1431 = vpop.f32.mrf.mxu0
        %v1432 = vadd.f32 %v978, %v1431
        %v1433 = vpop.f32.mrf.mxu0
        %v1434 = vadd.f32 %v978, %v1433
        %1435 = vmatprep.mubr.f32.mxu0 0.0
        %1436 = vmatmul.mubr.f32.gmra.mxu0 %v998
        %v1437 = vpop.f32.mrf.mxu0
        %v1438 = vadd.f32 %v983, %v1437
        %v1439 = vpop.f32.mrf.mxu0
        %v1440 = vadd.f32 %v983, %v1439
        %1441 = vmatprep.mubr.f32.mxu0 0.0
        %1442 = vmatmul.mubr.f32.gmra.mxu0 %v1001
        %v1443 = vpop.f32.mrf.mxu0
        %v1444 = vadd.f32 %v988, %v1443
        %v1445 = vpop.f32.mrf.mxu0
        %v1446 = vadd.f32 %v988, %v1445
        %1447 = vdwg.mxu0
        %1448 = vmatprep.subr.mxu0 0.0
        %1449 = vmatpush1.msra.mxu0 0.0
        %1450 = vmatprep.subr.mxu0 0.0
        %1451 = vmatpush1.msra.mxu0 0.0
        %1452 = vmatprep.subr.mxu0 0.0
        %1453 = vmatpush1.msra.mxu0 0.0
        %1454 = vmatprep.subr.mxu0 0.0
        %1455 = vmatpush1.msra.mxu0 0.0
        %1456 = vmatprep.subr.mxu0 0.0
        %1457 = vmatpush1.msra.mxu0 0.0
        %1458 = vmatprep.subr.mxu0 0.0
        %1459 = vmatpush1.msra.mxu0 0.0
        %1460 = vmatprep.subr.mxu0 0.0
        %1461 = vmatpush1.msra.mxu0 0.0
        %1462 = vmatprep.subr.mxu0 0.0
        %1463 = vmatpush1.msra.mxu0 0.0
        %1464 = vmatprep.subr.mxu0 0.0
        %1465 = vmatpush1.msra.mxu0 0.0
        %1466 = vmatprep.subr.mxu0 0.0
        %1467 = vmatpush1.msra.mxu0 0.0
        %1468 = vmatprep.subr.mxu0 0.0
        %1469 = vmatpush1.msra.mxu0 0.0
        %1470 = vmatprep.subr.mxu0 0.0
        %1471 = vmatpush1.msra.mxu0 0.0
        %1472 = vmatprep.subr.mxu0 %v957
        %1473 = vmatpush1.msra.mxu0 %v956
        %1474 = vmatprep.subr.mxu0 %v941
        %1475 = vmatpush1.msra.mxu0 %v940
        %1476 = vmatprep.subr.mxu0 %v925
        %1477 = vmatpush1.msra.mxu0 %v924
        %1478 = vmatprep.subr.mxu0 %v909
        %1479 = vmatpush1.msra.mxu0 %v908
        %1480 = vmatprep.subr.mxu0 0.0
        %1481 = vmatpush2.msra.mxu0 0.0
        %1482 = vmatprep.subr.mxu0 0.0
        %1483 = vmatpush2.msra.mxu0 0.0
        %1484 = vmatprep.subr.mxu0 0.0
        %1485 = vmatpush2.msra.mxu0 0.0
        %1486 = vmatprep.subr.mxu0 0.0
        %1487 = vmatpush2.msra.mxu0 0.0
        %1488 = vmatprep.subr.mxu0 0.0
        %1489 = vmatpush2.msra.mxu0 0.0
        %1490 = vmatprep.subr.mxu0 0.0
        %1491 = vmatpush2.msra.mxu0 0.0
        %1492 = vmatprep.subr.mxu0 0.0
        %1493 = vmatpush2.msra.mxu0 0.0
        %1494 = vmatprep.subr.mxu0 0.0
        %1495 = vmatpush2.msra.mxu0 0.0
        %1496 = vmatprep.subr.mxu0 0.0
        %1497 = vmatpush2.msra.mxu0 0.0
        %1498 = vmatprep.subr.mxu0 0.0
        %1499 = vmatpush2.msra.mxu0 0.0
        %1500 = vmatprep.subr.mxu0 0.0
        %1501 = vmatpush2.msra.mxu0 0.0
        %1502 = vmatprep.subr.mxu0 0.0
        %1503 = vmatpush2.msra.mxu0 0.0
        %1504 = vmatprep.subr.mxu0 0.0
        %1505 = vmatpush2.msra.mxu0 0.0
        %1506 = vmatprep.subr.mxu0 0.0
        %1507 = vmatpush2.msra.mxu0 0.0
        %1508 = vmatprep.subr.mxu0 0.0
        %1509 = vmatpush2.msra.mxu0 0.0
        %1510 = vmatprep.subr.mxu0 0.0
        %1511 = vmatpush2.msra.mxu0 0.0
        %1512 = vmatprep.mubr.f32.mxu0 0.0
        %1513 = vmatmul.mubr.f32.gmra.mxu0 %v992
        %v1514 = vpop.f32.mrf.mxu0
        %v1515 = vadd.f32 %v973, %v1514
        %v1516 = vpop.f32.mrf.mxu0
        %v1517 = vadd.f32 %v973, %v1516
        %1518 = vmatprep.mubr.f32.mxu0 0.0
        %1519 = vmatmul.mubr.f32.gmra.mxu0 %v995
        %v1520 = vpop.f32.mrf.mxu0
        %v1521 = vadd.f32 %v978, %v1520
        %v1522 = vpop.f32.mrf.mxu0
        %v1523 = vadd.f32 %v978, %v1522
        %1524 = vmatprep.mubr.f32.mxu0 0.0
        %1525 = vmatmul.mubr.f32.gmra.mxu0 %v998
        %v1526 = vpop.f32.mrf.mxu0
        %v1527 = vadd.f32 %v983, %v1526
        %v1528 = vpop.f32.mrf.mxu0
        %v1529 = vadd.f32 %v983, %v1528
        %1530 = vmatprep.mubr.f32.mxu0 0.0
        %1531 = vmatmul.mubr.f32.gmra.mxu0 %v1001
        %v1532 = vpop.f32.mrf.mxu0
        %v1533 = vadd.f32 %v988, %v1532
        %v1534 = vpop.f32.mrf.mxu0
        %v1535 = vadd.f32 %v988, %v1534
        %1536 = vdwg.mxu0
        %1537 = vmatprep.subr.mxu0 0.0
        %1538 = vmatpush1.msra.mxu0 0.0
        %1539 = vmatprep.subr.mxu0 0.0
        %1540 = vmatpush1.msra.mxu0 0.0
        %1541 = vmatprep.subr.mxu0 0.0
        %1542 = vmatpush1.msra.mxu0 0.0
        %1543 = vmatprep.subr.mxu0 0.0
        %1544 = vmatpush1.msra.mxu0 0.0
        %1545 = vmatprep.subr.mxu0 0.0
        %1546 = vmatpush1.msra.mxu0 0.0
        %1547 = vmatprep.subr.mxu0 0.0
        %1548 = vmatpush1.msra.mxu0 0.0
        %1549 = vmatprep.subr.mxu0 0.0
        %1550 = vmatpush1.msra.mxu0 0.0
        %1551 = vmatprep.subr.mxu0 0.0
        %1552 = vmatpush1.msra.mxu0 0.0
        %1553 = vmatprep.subr.mxu0 0.0
        %1554 = vmatpush1.msra.mxu0 0.0
        %1555 = vmatprep.subr.mxu0 0.0
        %1556 = vmatpush1.msra.mxu0 0.0
        %1557 = vmatprep.subr.mxu0 0.0
        %1558 = vmatpush1.msra.mxu0 0.0
        %1559 = vmatprep.subr.mxu0 0.0
        %1560 = vmatpush1.msra.mxu0 0.0
        %1561 = vmatprep.subr.mxu0 %v959
        %1562 = vmatpush1.msra.mxu0 %v958
        %1563 = vmatprep.subr.mxu0 %v943
        %1564 = vmatpush1.msra.mxu0 %v942
        %1565 = vmatprep.subr.mxu0 %v927
        %1566 = vmatpush1.msra.mxu0 %v926
        %1567 = vmatprep.subr.mxu0 %v911
        %1568 = vmatpush1.msra.mxu0 %v910
        %1569 = vmatprep.subr.mxu0 0.0
        %1570 = vmatpush2.msra.mxu0 0.0
        %1571 = vmatprep.subr.mxu0 0.0
        %1572 = vmatpush2.msra.mxu0 0.0
        %1573 = vmatprep.subr.mxu0 0.0
        %1574 = vmatpush2.msra.mxu0 0.0
        %1575 = vmatprep.subr.mxu0 0.0
        %1576 = vmatpush2.msra.mxu0 0.0
        %1577 = vmatprep.subr.mxu0 0.0
        %1578 = vmatpush2.msra.mxu0 0.0
        %1579 = vmatprep.subr.mxu0 0.0
        %1580 = vmatpush2.msra.mxu0 0.0
        %1581 = vmatprep.subr.mxu0 0.0
        %1582 = vmatpush2.msra.mxu0 0.0
        %1583 = vmatprep.subr.mxu0 0.0
        %1584 = vmatpush2.msra.mxu0 0.0
        %1585 = vmatprep.subr.mxu0 0.0
        %1586 = vmatpush2.msra.mxu0 0.0
        %1587 = vmatprep.subr.mxu0 0.0
        %1588 = vmatpush2.msra.mxu0 0.0
        %1589 = vmatprep.subr.mxu0 0.0
        %1590 = vmatpush2.msra.mxu0 0.0
        %1591 = vmatprep.subr.mxu0 0.0
        %1592 = vmatpush2.msra.mxu0 0.0
        %1593 = vmatprep.subr.mxu0 0.0
        %1594 = vmatpush2.msra.mxu0 0.0
        %1595 = vmatprep.subr.mxu0 0.0
        %1596 = vmatpush2.msra.mxu0 0.0
        %1597 = vmatprep.subr.mxu0 0.0
        %1598 = vmatpush2.msra.mxu0 0.0
        %1599 = vmatprep.subr.mxu0 0.0
        %1600 = vmatpush2.msra.mxu0 0.0
        %1601 = vmatprep.mubr.f32.mxu0 0.0
        %1602 = vmatmul.mubr.f32.gmra.mxu0 %v992
        %v1603 = vpop.f32.mrf.mxu0
        %v1604 = vadd.f32 %v973, %v1603
        %v1605 = vpop.f32.mrf.mxu0
        %v1606 = vadd.f32 %v973, %v1605
        %1607 = vmatprep.mubr.f32.mxu0 0.0
        %1608 = vmatmul.mubr.f32.gmra.mxu0 %v995
        %v1609 = vpop.f32.mrf.mxu0
        %v1610 = vadd.f32 %v978, %v1609
        %v1611 = vpop.f32.mrf.mxu0
        %v1612 = vadd.f32 %v978, %v1611
        %1613 = vmatprep.mubr.f32.mxu0 0.0
        %1614 = vmatmul.mubr.f32.gmra.mxu0 %v998
        %v1615 = vpop.f32.mrf.mxu0
        %v1616 = vadd.f32 %v983, %v1615
        %v1617 = vpop.f32.mrf.mxu0
        %v1618 = vadd.f32 %v983, %v1617
        %1619 = vmatprep.mubr.f32.mxu0 0.0
        %1620 = vmatmul.mubr.f32.gmra.mxu0 %v1001
        %v1621 = vpop.f32.mrf.mxu0
        %v1622 = vadd.f32 %v988, %v1621
        %v1623 = vpop.f32.mrf.mxu0
        %v1624 = vadd.f32 %v988, %v1623
        %1625 = vdwg.mxu0
        %1626 = vmatprep.subr.mxu0 0.0
        %1627 = vmatpush1.msra.mxu0 0.0
        %1628 = vmatprep.subr.mxu0 0.0
        %1629 = vmatpush1.msra.mxu0 0.0
        %1630 = vmatprep.subr.mxu0 0.0
        %1631 = vmatpush1.msra.mxu0 0.0
        %1632 = vmatprep.subr.mxu0 0.0
        %1633 = vmatpush1.msra.mxu0 0.0
        %1634 = vmatprep.subr.mxu0 0.0
        %1635 = vmatpush1.msra.mxu0 0.0
        %1636 = vmatprep.subr.mxu0 0.0
        %1637 = vmatpush1.msra.mxu0 0.0
        %1638 = vmatprep.subr.mxu0 0.0
        %1639 = vmatpush1.msra.mxu0 0.0
        %1640 = vmatprep.subr.mxu0 0.0
        %1641 = vmatpush1.msra.mxu0 0.0
        %1642 = vmatprep.subr.mxu0 0.0
        %1643 = vmatpush1.msra.mxu0 0.0
        %1644 = vmatprep.subr.mxu0 0.0
        %1645 = vmatpush1.msra.mxu0 0.0
        %1646 = vmatprep.subr.mxu0 0.0
        %1647 = vmatpush1.msra.mxu0 0.0
        %1648 = vmatprep.subr.mxu0 0.0
        %1649 = vmatpush1.msra.mxu0 0.0
        %1650 = vmatprep.subr.mxu0 %v961
        %1651 = vmatpush1.msra.mxu0 %v960
        %1652 = vmatprep.subr.mxu0 %v945
        %1653 = vmatpush1.msra.mxu0 %v944
        %1654 = vmatprep.subr.mxu0 %v929
        %1655 = vmatpush1.msra.mxu0 %v928
        %1656 = vmatprep.subr.mxu0 %v913
        %1657 = vmatpush1.msra.mxu0 %v912
        %1658 = vmatprep.subr.mxu0 0.0
        %1659 = vmatpush2.msra.mxu0 0.0
        %1660 = vmatprep.subr.mxu0 0.0
        %1661 = vmatpush2.msra.mxu0 0.0
        %1662 = vmatprep.subr.mxu0 0.0
        %1663 = vmatpush2.msra.mxu0 0.0
        %1664 = vmatprep.subr.mxu0 0.0
        %1665 = vmatpush2.msra.mxu0 0.0
        %1666 = vmatprep.subr.mxu0 0.0
        %1667 = vmatpush2.msra.mxu0 0.0
        %1668 = vmatprep.subr.mxu0 0.0
        %1669 = vmatpush2.msra.mxu0 0.0
        %1670 = vmatprep.subr.mxu0 0.0
        %1671 = vmatpush2.msra.mxu0 0.0
        %1672 = vmatprep.subr.mxu0 0.0
        %1673 = vmatpush2.msra.mxu0 0.0
        %1674 = vmatprep.subr.mxu0 0.0
        %1675 = vmatpush2.msra.mxu0 0.0
        %1676 = vmatprep.subr.mxu0 0.0
        %1677 = vmatpush2.msra.mxu0 0.0
        %1678 = vmatprep.subr.mxu0 0.0
        %1679 = vmatpush2.msra.mxu0 0.0
        %1680 = vmatprep.subr.mxu0 0.0
        %1681 = vmatpush2.msra.mxu0 0.0
        %1682 = vmatprep.subr.mxu0 0.0
        %1683 = vmatpush2.msra.mxu0 0.0
        %1684 = vmatprep.subr.mxu0 0.0
        %1685 = vmatpush2.msra.mxu0 0.0
        %1686 = vmatprep.subr.mxu0 0.0
        %1687 = vmatpush2.msra.mxu0 0.0
        %1688 = vmatprep.subr.mxu0 0.0
        %1689 = vmatpush2.msra.mxu0 0.0
        %1690 = vmatprep.mubr.f32.mxu0 0.0
        %1691 = vmatmul.mubr.f32.gmra.mxu0 %v992
        %v1692 = vpop.f32.mrf.mxu0
        %v1693 = vadd.f32 %v973, %v1692
        %v1694 = vpop.f32.mrf.mxu0
        %v1695 = vadd.f32 %v973, %v1694
        %1696 = vmatprep.mubr.f32.mxu0 0.0
        %1697 = vmatmul.mubr.f32.gmra.mxu0 %v995
        %v1698 = vpop.f32.mrf.mxu0
        %v1699 = vadd.f32 %v978, %v1698
        %v1700 = vpop.f32.mrf.mxu0
        %v1701 = vadd.f32 %v978, %v1700
        %1702 = vmatprep.mubr.f32.mxu0 0.0
        %1703 = vmatmul.mubr.f32.gmra.mxu0 %v998
        %v1704 = vpop.f32.mrf.mxu0
        %v1705 = vadd.f32 %v983, %v1704
        %v1706 = vpop.f32.mrf.mxu0
        %v1707 = vadd.f32 %v983, %v1706
        %1708 = vmatprep.mubr.f32.mxu0 0.0
        %1709 = vmatmul.mubr.f32.gmra.mxu0 %v1001
        %v1710 = vpop.f32.mrf.mxu0
        %v1711 = vadd.f32 %v988, %v1710
        %v1712 = vpop.f32.mrf.mxu0
        %v1713 = vadd.f32 %v988, %v1712
        %1714 = vdwg.mxu0
        %v1715 = vtanh.pop %v1070
        %v1716 = vtanh.pop %v1072
        %v1717 = vtanh.pop %v1159
        %v1718 = vtanh.pop %v1161
        %v1719 = vtanh.pop %v1248
        %v1720 = vtanh.pop %v1250
        %v1721 = vtanh.pop %v1337
        %v1722 = vtanh.pop %v1339
        %v1723 = vtanh.pop %v1426
        %v1724 = vtanh.pop %v1428
        %v1725 = vtanh.pop %v1515
        %v1726 = vtanh.pop %v1517
        %v1727 = vtanh.pop %v1604
        %v1728 = vtanh.pop %v1606
        %v1729 = vtanh.pop %v1693
        %v1730 = vtanh.pop %v1695
        %v1731 = vtanh.pop %v1076
        %v1732 = vtanh.pop %v1078
        %v1733 = vtanh.pop %v1165
        %v1734 = vtanh.pop %v1167
        %v1735 = vtanh.pop %v1254
        %v1736 = vtanh.pop %v1256
        %v1737 = vtanh.pop %v1343
        %v1738 = vtanh.pop %v1345
        %v1739 = vtanh.pop %v1432
        %v1740 = vtanh.pop %v1434
        %v1741 = vtanh.pop %v1521
        %v1742 = vtanh.pop %v1523
        %v1743 = vtanh.pop %v1610
        %v1744 = vtanh.pop %v1612
        %v1745 = vtanh.pop %v1699
        %v1746 = vtanh.pop %v1701
        %v1747 = vtanh.pop %v1082
        %v1748 = vtanh.pop %v1084
        %v1749 = vtanh.pop %v1171
        %v1750 = vtanh.pop %v1173
        %v1751 = vtanh.pop %v1260
        %v1752 = vtanh.pop %v1262
        %v1753 = vtanh.pop %v1349
        %v1754 = vtanh.pop %v1351
        %v1755 = vtanh.pop %v1438
        %v1756 = vtanh.pop %v1440
        %v1757 = vtanh.pop %v1527
        %v1758 = vtanh.pop %v1529
        %v1759 = vtanh.pop %v1616
        %v1760 = vtanh.pop %v1618
        %v1761 = vtanh.pop %v1705
        %v1762 = vtanh.pop %v1707
        %v1763 = vtanh.pop %v1088
        %v1764 = vtanh.pop %v1090
        %v1765 = vtanh.pop %v1177
        %v1766 = vtanh.pop %v1179
        %v1767 = vtanh.pop %v1266
        %v1768 = vtanh.pop %v1268
        %v1769 = vtanh.pop %v1355
        %v1770 = vtanh.pop %v1357
        %v1771 = vtanh.pop %v1444
        %v1772 = vtanh.pop %v1446
        %v1773 = vtanh.pop %v1533
        %v1774 = vtanh.pop %v1535
        %v1775 = vtanh.pop %v1622
        %v1776 = vtanh.pop %v1624
        %v1777 = vtanh.pop %v1711
        %v1778 = vtanh.pop %v1713
        %v1779 = vld [vmem:[%s5] sm:$0xff]
        %v1780 = vld [vmem:[%s5 + $0x8] sm:$0xff]
        %v1781 = vld [vmem:[%s5 + $0x10] sm:$0xff]
        %v1782 = vld [vmem:[%s5 + $0x18] sm:$0xff]
        %v1783 = vld [vmem:[#allocation2] sm:$0x1]
        %1785 = vset.pattern.permute.xlu0 0
        %1786 = vperm.xlu0 %1785, %v1779
        %v1787 = vpop.permute.xlu0 %1786
        %1790 = vset.pattern.permute.xlu0 0
        %1791 = vperm.xlu0 %1790, %v1780
        %v1792 = vpop.permute.xlu0 %1791
        %1795 = vset.pattern.permute.xlu0 0
        %1796 = vperm.xlu0 %1795, %v1781
        %v1797 = vpop.permute.xlu0 %1796
        %1800 = vset.pattern.permute.xlu0 0
        %1801 = vperm.xlu0 %1800, %v1782
        %v1802 = vpop.permute.xlu0 %1801
        %v1804 = vmul.f32 %v1787, %v1715
        %v1805 = vmul.f32 %v1787, %v1716
        %v1806 = vmul.f32 %v1787, %v1717
        %v1807 = vmul.f32 %v1787, %v1718
        %v1808 = vmul.f32 %v1787, %v1719
        %v1809 = vmul.f32 %v1787, %v1720
        %v1810 = vmul.f32 %v1787, %v1721
        %v1811 = vmul.f32 %v1787, %v1722
        %v1812 = vmul.f32 %v1787, %v1723
        %v1813 = vmul.f32 %v1787, %v1724
        %v1814 = vmul.f32 %v1787, %v1725
        %v1815 = vmul.f32 %v1787, %v1726
        %v1816 = vmul.f32 %v1787, %v1727
        %v1817 = vmul.f32 %v1787, %v1728
        %v1818 = vmul.f32 %v1787, %v1729
        %v1819 = vmul.f32 %v1787, %v1730
        %v1820 = vmul.f32 %v1792, %v1731
        %v1821 = vmul.f32 %v1792, %v1732
        %v1822 = vmul.f32 %v1792, %v1733
        %v1823 = vmul.f32 %v1792, %v1734
        %v1824 = vmul.f32 %v1792, %v1735
        %v1825 = vmul.f32 %v1792, %v1736
        %v1826 = vmul.f32 %v1792, %v1737
        %v1827 = vmul.f32 %v1792, %v1738
        %v1828 = vmul.f32 %v1792, %v1739
        %v1829 = vmul.f32 %v1792, %v1740
        %v1830 = vmul.f32 %v1792, %v1741
        %v1831 = vmul.f32 %v1792, %v1742
        %v1832 = vmul.f32 %v1792, %v1743
        %v1833 = vmul.f32 %v1792, %v1744
        %v1834 = vmul.f32 %v1792, %v1745
        %v1835 = vmul.f32 %v1792, %v1746
        %v1836 = vmul.f32 %v1797, %v1747
        %v1837 = vmul.f32 %v1797, %v1748
        %v1838 = vmul.f32 %v1797, %v1749
        %v1839 = vmul.f32 %v1797, %v1750
        %v1840 = vmul.f32 %v1797, %v1751
        %v1841 = vmul.f32 %v1797, %v1752
        %v1842 = vmul.f32 %v1797, %v1753
        %v1843 = vmul.f32 %v1797, %v1754
        %v1844 = vmul.f32 %v1797, %v1755
        %v1845 = vmul.f32 %v1797, %v1756
        %v1846 = vmul.f32 %v1797, %v1757
        %v1847 = vmul.f32 %v1797, %v1758
        %v1848 = vmul.f32 %v1797, %v1759
        %v1849 = vmul.f32 %v1797, %v1760
        %v1850 = vmul.f32 %v1797, %v1761
        %v1851 = vmul.f32 %v1797, %v1762
        %v1852 = vmul.f32 %v1802, %v1763
        %v1853 = vmul.f32 %v1802, %v1764
        %v1854 = vmul.f32 %v1802, %v1765
        %v1855 = vmul.f32 %v1802, %v1766
        %v1856 = vmul.f32 %v1802, %v1767
        %v1857 = vmul.f32 %v1802, %v1768
        %v1858 = vmul.f32 %v1802, %v1769
        %v1859 = vmul.f32 %v1802, %v1770
        %v1860 = vmul.f32 %v1802, %v1771
        %v1861 = vmul.f32 %v1802, %v1772
        %v1862 = vmul.f32 %v1802, %v1773
        %v1863 = vmul.f32 %v1802, %v1774
        %v1864 = vmul.f32 %v1802, %v1775
        %v1865 = vmul.f32 %v1802, %v1776
        %v1866 = vmul.f32 %v1802, %v1777
        %v1867 = vmul.f32 %v1802, %v1778
        %v1868 = vadd.f32 %v1804, %v1820
        %v1869 = vadd.f32 %v1868, %v1836
        %v1870 = vadd.f32 %v1869, %v1852
        %v1871 = vrot.slane %v1870, 4
        %v1872 = vadd.f32 %v1870, %v1871
        %v1873 = vrot.slane %v1872, 2
        %v1874 = vadd.f32 %v1872, %v1873
        %v1875 = vrot.slane %v1874, 1
        %v1876 = vadd.f32 %v1874, %v1875
        %v1877 = vadd.f32 %v1805, %v1821
        %v1878 = vadd.f32 %v1877, %v1837
        %v1879 = vadd.f32 %v1878, %v1853
        %v1880 = vrot.slane %v1879, 4
        %v1881 = vadd.f32 %v1879, %v1880
        %v1882 = vrot.slane %v1881, 2
        %v1883 = vadd.f32 %v1881, %v1882
        %v1884 = vrot.slane %v1883, 1
        %v1885 = vadd.f32 %v1883, %v1884
        %v1886 = vadd.f32 %v1806, %v1822
        %v1887 = vadd.f32 %v1886, %v1838
        %v1888 = vadd.f32 %v1887, %v1854
        %v1889 = vrot.slane %v1888, 4
        %v1890 = vadd.f32 %v1888, %v1889
        %v1891 = vrot.slane %v1890, 2
        %v1892 = vadd.f32 %v1890, %v1891
        %v1893 = vrot.slane %v1892, 1
        %v1894 = vadd.f32 %v1892, %v1893
        %v1895 = vadd.f32 %v1807, %v1823
        %v1896 = vadd.f32 %v1895, %v1839
        %v1897 = vadd.f32 %v1896, %v1855
        %v1898 = vrot.slane %v1897, 4
        %v1899 = vadd.f32 %v1897, %v1898
        %v1900 = vrot.slane %v1899, 2
        %v1901 = vadd.f32 %v1899, %v1900
        %v1902 = vrot.slane %v1901, 1
        %v1903 = vadd.f32 %v1901, %v1902
        %v1904 = vadd.f32 %v1808, %v1824
        %v1905 = vadd.f32 %v1904, %v1840
        %v1906 = vadd.f32 %v1905, %v1856
        %v1907 = vrot.slane %v1906, 4
        %v1908 = vadd.f32 %v1906, %v1907
        %v1909 = vrot.slane %v1908, 2
        %v1910 = vadd.f32 %v1908, %v1909
        %v1911 = vrot.slane %v1910, 1
        %v1912 = vadd.f32 %v1910, %v1911
        %v1913 = vadd.f32 %v1809, %v1825
        %v1914 = vadd.f32 %v1913, %v1841
        %v1915 = vadd.f32 %v1914, %v1857
        %v1916 = vrot.slane %v1915, 4
        %v1917 = vadd.f32 %v1915, %v1916
        %v1918 = vrot.slane %v1917, 2
        %v1919 = vadd.f32 %v1917, %v1918
        %v1920 = vrot.slane %v1919, 1
        %v1921 = vadd.f32 %v1919, %v1920
        %v1922 = vadd.f32 %v1810, %v1826
        %v1923 = vadd.f32 %v1922, %v1842
        %v1924 = vadd.f32 %v1923, %v1858
        %v1925 = vrot.slane %v1924, 4
        %v1926 = vadd.f32 %v1924, %v1925
        %v1927 = vrot.slane %v1926, 2
        %v1928 = vadd.f32 %v1926, %v1927
        %v1929 = vrot.slane %v1928, 1
        %v1930 = vadd.f32 %v1928, %v1929
        %v1931 = vadd.f32 %v1811, %v1827
        %v1932 = vadd.f32 %v1931, %v1843
        %v1933 = vadd.f32 %v1932, %v1859
        %v1934 = vrot.slane %v1933, 4
        %v1935 = vadd.f32 %v1933, %v1934
        %v1936 = vrot.slane %v1935, 2
        %v1937 = vadd.f32 %v1935, %v1936
        %v1938 = vrot.slane %v1937, 1
        %v1939 = vadd.f32 %v1937, %v1938
        %v1940 = vadd.f32 %v1812, %v1828
        %v1941 = vadd.f32 %v1940, %v1844
        %v1942 = vadd.f32 %v1941, %v1860
        %v1943 = vrot.slane %v1942, 4
        %v1944 = vadd.f32 %v1942, %v1943
        %v1945 = vrot.slane %v1944, 2
        %v1946 = vadd.f32 %v1944, %v1945
        %v1947 = vrot.slane %v1946, 1
        %v1948 = vadd.f32 %v1946, %v1947
        %v1949 = vadd.f32 %v1813, %v1829
        %v1950 = vadd.f32 %v1949, %v1845
        %v1951 = vadd.f32 %v1950, %v1861
        %v1952 = vrot.slane %v1951, 4
        %v1953 = vadd.f32 %v1951, %v1952
        %v1954 = vrot.slane %v1953, 2
        %v1955 = vadd.f32 %v1953, %v1954
        %v1956 = vrot.slane %v1955, 1
        %v1957 = vadd.f32 %v1955, %v1956
        %v1958 = vadd.f32 %v1814, %v1830
        %v1959 = vadd.f32 %v1958, %v1846
        %v1960 = vadd.f32 %v1959, %v1862
        %v1961 = vrot.slane %v1960, 4
        %v1962 = vadd.f32 %v1960, %v1961
        %v1963 = vrot.slane %v1962, 2
        %v1964 = vadd.f32 %v1962, %v1963
        %v1965 = vrot.slane %v1964, 1
        %v1966 = vadd.f32 %v1964, %v1965
        %v1967 = vadd.f32 %v1815, %v1831
        %v1968 = vadd.f32 %v1967, %v1847
        %v1969 = vadd.f32 %v1968, %v1863
        %v1970 = vrot.slane %v1969, 4
        %v1971 = vadd.f32 %v1969, %v1970
        %v1972 = vrot.slane %v1971, 2
        %v1973 = vadd.f32 %v1971, %v1972
        %v1974 = vrot.slane %v1973, 1
        %v1975 = vadd.f32 %v1973, %v1974
        %v1976 = vadd.f32 %v1816, %v1832
        %v1977 = vadd.f32 %v1976, %v1848
        %v1978 = vadd.f32 %v1977, %v1864
        %v1979 = vrot.slane %v1978, 4
        %v1980 = vadd.f32 %v1978, %v1979
        %v1981 = vrot.slane %v1980, 2
        %v1982 = vadd.f32 %v1980, %v1981
        %v1983 = vrot.slane %v1982, 1
        %v1984 = vadd.f32 %v1982, %v1983
        %v1985 = vadd.f32 %v1817, %v1833
        %v1986 = vadd.f32 %v1985, %v1849
        %v1987 = vadd.f32 %v1986, %v1865
        %v1988 = vrot.slane %v1987, 4
        %v1989 = vadd.f32 %v1987, %v1988
        %v1990 = vrot.slane %v1989, 2
        %v1991 = vadd.f32 %v1989, %v1990
        %v1992 = vrot.slane %v1991, 1
        %v1993 = vadd.f32 %v1991, %v1992
        %v1994 = vadd.f32 %v1818, %v1834
        %v1995 = vadd.f32 %v1994, %v1850
        %v1996 = vadd.f32 %v1995, %v1866
        %v1997 = vrot.slane %v1996, 4
        %v1998 = vadd.f32 %v1996, %v1997
        %v1999 = vrot.slane %v1998, 2
        %v2000 = vadd.f32 %v1998, %v1999
        %v2001 = vrot.slane %v2000, 1
        %v2002 = vadd.f32 %v2000, %v2001
        %v2003 = vadd.f32 %v1819, %v1835
        %v2004 = vadd.f32 %v2003, %v1851
        %v2005 = vadd.f32 %v2004, %v1867
        %v2006 = vrot.slane %v2005, 4
        %v2007 = vadd.f32 %v2005, %v2006
        %v2008 = vrot.slane %v2007, 2
        %v2009 = vadd.f32 %v2007, %v2008
        %v2010 = vrot.slane %v2009, 1
        %v2011 = vadd.f32 %v2009, %v2010
        %2013 = vset.pattern.permute.xlu0 0
        %2014 = vperm.xlu0 %2013, %v1783
        %v2015 = vpop.permute.xlu0 %2014
        %v2017 = vlaneseq
        %v2018 = vshrl.u32 %v2017, 7
        %v2019 = vsub.s32 0, %v2018
        %v2020 = vrot.slane %v2015, %v2019
        %v2021 = vadd.f32 %v1876, %v2020
        %v2022 = vadd.f32 %v1885, %v2020
        %v2023 = vadd.f32 %v1894, %v2020
        %v2024 = vadd.f32 %v1903, %v2020
        %v2025 = vadd.f32 %v1912, %v2020
        %v2026 = vadd.f32 %v1921, %v2020
        %v2027 = vadd.f32 %v1930, %v2020
        %v2028 = vadd.f32 %v1939, %v2020
        %v2029 = vadd.f32 %v1948, %v2020
        %v2030 = vadd.f32 %v1957, %v2020
        %v2031 = vadd.f32 %v1966, %v2020
        %v2032 = vadd.f32 %v1975, %v2020
        %v2033 = vadd.f32 %v1984, %v2020
        %v2034 = vadd.f32 %v1993, %v2020
        %v2035 = vadd.f32 %v2002, %v2020
        %v2036 = vadd.f32 %v2011, %v2020
        %v2053 = vcombine.low %v2021, %v2022
        %v2054 = vcombine.low %v2023, %v2024
        %v2055 = vcombine.low %v2025, %v2026
        %v2056 = vcombine.low %v2027, %v2028
        %v2058 = vunpack.c.l.s4 1966171168
        %v2059 = vunpack.c.0.s8 %v2058
        %v2060 = vlaneseq
        %v2061 = vshrl.u32 %v2060, 7
        %v2062 = vsub.s32 %v2059, %v2061
        %v2063 = vrot.slane %v2053, %v2062
        %v2065 = vunpack.c.l.s4 1966171168
        %v2066 = vunpack.c.0.s8 %v2065
        %v2067 = vlaneseq
        %v2068 = vshrl.u32 %v2067, 7
        %v2069 = vsub.s32 %v2066, %v2068
        %v2070 = vrot.slane %v2054, %v2069
        %v2072 = vunpack.c.l.s4 1966171168
        %v2073 = vunpack.c.0.s8 %v2072
        %v2074 = vlaneseq
        %v2075 = vshrl.u32 %v2074, 7
        %v2076 = vsub.s32 %v2073, %v2075
        %v2077 = vrot.slane %v2055, %v2076
        %v2079 = vunpack.c.l.s4 1966171168
        %v2080 = vunpack.c.0.s8 %v2079
        %v2081 = vlaneseq
        %v2082 = vshrl.u32 %v2081, 7
        %v2083 = vsub.s32 %v2080, %v2082
        %v2084 = vrot.slane %v2056, %v2083
        %v2085 = vcombine.low %v2063, %v2070
        %v2086 = vcombine.low %v2077, %v2084
        %v2088 = vunpack.c.l.s4 1966171168
        %v2089 = vunpack.c.0.s8 %v2088
        %v2090 = vlaneseq
        %v2091 = vshrl.u32 %v2090, 7
        %v2092 = vsub.s32 %v2089, %v2091
        %v2093 = vrot.slane %v2085, %v2092
        %v2095 = vunpack.c.l.s4 1966171168
        %v2096 = vunpack.c.0.s8 %v2095
        %v2097 = vlaneseq
        %v2098 = vshrl.u32 %v2097, 7
        %v2099 = vsub.s32 %v2096, %v2098
        %v2100 = vrot.slane %v2086, %v2099
        %v2101 = vcombine.low %v2093, %v2100
        %v2102 = vcombine.low %v2029, %v2030
        %v2103 = vcombine.low %v2031, %v2032
        %v2104 = vcombine.low %v2033, %v2034
        %v2105 = vcombine.low %v2035, %v2036
        %v2107 = vunpack.c.l.s4 1966171168
        %v2108 = vunpack.c.0.s8 %v2107
        %v2109 = vlaneseq
        %v2110 = vshrl.u32 %v2109, 7
        %v2111 = vsub.s32 %v2108, %v2110
        %v2112 = vrot.slane %v2102, %v2111
        %v2114 = vunpack.c.l.s4 1966171168
        %v2115 = vunpack.c.0.s8 %v2114
        %v2116 = vlaneseq
        %v2117 = vshrl.u32 %v2116, 7
        %v2118 = vsub.s32 %v2115, %v2117
        %v2119 = vrot.slane %v2103, %v2118
        %v2121 = vunpack.c.l.s4 1966171168
        %v2122 = vunpack.c.0.s8 %v2121
        %v2123 = vlaneseq
        %v2124 = vshrl.u32 %v2123, 7
        %v2125 = vsub.s32 %v2122, %v2124
        %v2126 = vrot.slane %v2104, %v2125
        %v2128 = vunpack.c.l.s4 1966171168
        %v2129 = vunpack.c.0.s8 %v2128
        %v2130 = vlaneseq
        %v2131 = vshrl.u32 %v2130, 7
        %v2132 = vsub.s32 %v2129, %v2131
        %v2133 = vrot.slane %v2105, %v2132
        %v2134 = vcombine.low %v2112, %v2119
        %v2135 = vcombine.low %v2126, %v2133
        %v2137 = vunpack.c.l.s4 1966171168
        %v2138 = vunpack.c.0.s8 %v2137
        %v2139 = vlaneseq
        %v2140 = vshrl.u32 %v2139, 7
        %v2141 = vsub.s32 %v2138, %v2140
        %v2142 = vrot.slane %v2134, %v2141
        %v2144 = vunpack.c.l.s4 1966171168
        %v2145 = vunpack.c.0.s8 %v2144
        %v2146 = vlaneseq
        %v2147 = vshrl.u32 %v2146, 7
        %v2148 = vsub.s32 %v2145, %v2147
        %v2149 = vrot.slane %v2135, %v2148
        %v2150 = vcombine.low %v2142, %v2149
        %2153 = vst [vmem:[%s274] sm:$0xff] %v2101
        %2154 = vst [vmem:[%s274 + $0x8] sm:$0xff] %v2150
        %s2155 = sand.u32 %s183, 1
        %s2156 = scalar_lea.sflag [#allocation4], %s2155
        %s2157 = sand.u32 %s183, 1
        %s2158 = smul.addr %s2157, 16
        %s2159 = scalar_lea.vmem [#allocation3], %s2158
        // Predicated region
        $region49: #{pinn_forward.1} parent=47 // pred_check
          %p2160 = pneg %p193
        $region50: #{pinn_forward.1} parent=47 // pred_check_branch
          %2162 = sbr.rel (%p2160) target = $region52
        $region51: #{pinn_forward.1} parent=47 // pred_region
          %s2163 = smul.u32 16, %s23
          %s2165 = ssub.s32 256, 256
          %2166 = vsyncadd %s2156, %s2165
          %s2167 = smul.addr %s2163, 16
          %s2168 = scalar_lea.hbm %s7, %s2167
          %s2170 = sshll.u32 %s2159, 4
          %s2171 = int_to_ptr.vmem [resolvable:$true] %s2170
          %2173 = dma.vmem_to_hbm [thread:$0]  %s2171, 256, %s2168, %s2156
        $region52: #{pinn_forward.1} parent=47 // pred_fallthru
          _
      $region48: #{pinn_forward.1} parent=5 // pred_fallthru
        _
      %p2174 = scmp.le.s32.totalorder 2, %s18
      // Predicated region
      $region53: #{pinn_forward.1} parent=5 // pred_check
        %p2175 = pneg %p2174
      $region54: #{pinn_forward.1} parent=5 // pred_check_branch
        %2177 = sbr.rel (%p2175) target = $region56
      $region55: #{pinn_forward.1} parent=5 // pred_region
        %s2178 = ssub.s32 %s18, 2
        // Predicated region
        $region57: #{pinn_forward.1} parent=55 // pred_check
          %p2179 = pneg %p199
        $region58: #{pinn_forward.1} parent=55 // pred_check_branch
          %2181 = sbr.rel (%p2179) target = $region60
        $region59: #{pinn_forward.1} parent=55 // pred_region
          %s2182 = sand.u32 %s184, 1
          %s2183 = scalar_lea.sflag [#allocation4], %s2182
          %s2184 = sand.u32 %s184, 1
          %s2185 = smul.addr %s2184, 16
          %s2186 = scalar_lea.vmem [#allocation3], %s2185
          %2187 = dma.done %s2183, 256
        $region60: #{pinn_forward.1} parent=55 // pred_fallthru
          _
      $region56: #{pinn_forward.1} parent=5 // pred_fallthru
        _
    $region6: #{pinn_forward.1} parent=1 // loop_footer
      %s22 = sadd.s32 1, %s18
    $region7: #{pinn_forward.1} parent=1 // loop_footer_branch
      %17 = sbr.rel target = $region3
    $region8: #{pinn_forward.1} parent=1 // loop_exit
      _
    %2188 = vsyncpa [#allocation4], 1
    %s2189 = scalar_lea.sflag [#allocation4], 1
    %2190 = vsyncpa %s2189, 1

</llo_original>
